<compile_context>
chip_gen: v6e
topology: v6e:2x2x1
jax: 0.10.0
libtpu: 0.0.40
codegen_flags: <defaults>
</compile_context>

<pallas_src>
import functools
import math

import jax
import jax.numpy as jnp
from jax.experimental import pallas as pl
from jax.experimental.pallas import tpu as pltpu

EPS = 1e-5                       # InstanceNorm2d default (affine=False, biased var)
VMEM_LIMIT = 64 * 1024 * 1024    # cap scoped VMEM at v7x's physical size.
TILE_BUDGET = 40 * 1024 * 1024   # VMEM budget for auto row-tiling (im2col path)
TAP_BUDGET = 44 * 1024 * 1024    # VMEM budget for the fused tap-loop conv path
N_GF = 64
N_RB = 6


def _round_up(x, m):
    return (x + m - 1) // m * m


def _row_tiling(hw, tile_hw):
    """-> (tile, padded_rows, num_tiles)."""
    if hw <= tile_hw:
        return hw, hw, 1
    hwp = _round_up(hw, tile_hw)
    return tile_hw, hwp, hwp // tile_hw


def _auto_tile(hw, k, c, out_bytes=2):
    """Largest row tile (multiple of 8) whose 2x-buffered bf16 patch/out tiles,
    resident [K, C] weights and f32 epilogue intermediates fit TILE_BUDGET."""
    per_row = 4 * k + (8 + 2 * out_bytes) * c
    avail = max(TILE_BUDGET - 2 * k * c, 256 * per_row)
    t = min(max(avail // per_row, 256), 8192)
    if hw <= t:
        return int(t)
    ntiles = -(-hw // t)
    return int(_round_up(-(-hw // ntiles), 8))


def _tap_fits(hp_wp, ho_wp, cin, cp, ntaps, out_bytes, has_res):
    """VMEM estimate for the single-tile tap-loop conv (per batch block,
    double-buffered across the batch grid, plus f32 accumulator headroom)."""
    need = (4 * hp_wp * cin
            + 2 * ho_wp * cp * out_bytes
            + 8 * ho_wp * cp
            + 2 * ntaps * cin * cp)
    if has_res:
        need += 4 * ho_wp * cp
    return need <= TAP_BUDGET


def _apply_act(y, act):
    if act == "relu":
        return jnp.maximum(y, 0.0)
    if act == "tanh":
        return jnp.tanh(y)
    return y


# ----------------------------------------------------------------------------
# Pallas kernels
# ----------------------------------------------------------------------------
def _tap_conv_kernel(*refs, offsets, nrows, act, norm, residual, inv_cnt):
    """Stride-1 conv as a sum of per-tap matmuls over contiguous row windows of
    the flattened padded input, then fused IN (masked stats) / act / residual."""
    x_ref, w_ref, m_ref = refs[0], refs[1], refs[2]
    i = 3
    if not norm:
        b_ref = refs[i]; i += 1
    if residual:
        r_ref = refs[i]; i += 1
    o_ref = refs[i]

    y = jnp.dot(x_ref[pl.ds(offsets[0], nrows), :], w_ref[0],
                preferred_element_type=jnp.float32)
    for t in range(1, len(offsets)):
        y = y + jnp.dot(x_ref[pl.ds(offsets[t], nrows), :], w_ref[t],
                        preferred_element_type=jnp.float32)
    if norm:
        # bias skipped: InstanceNorm's mean subtraction cancels it exactly.
        m = m_ref[...]                          # 1.0 on valid columns, else 0.0
        ym = y * m
        mean = jnp.sum(ym, axis=0, keepdims=True) * inv_cnt
        ex2 = jnp.sum(ym * y, axis=0, keepdims=True) * inv_cnt
        var = jnp.maximum(ex2 - mean * mean, 0.0)
        y = (y - mean) * jax.lax.rsqrt(var + EPS)
    else:
        y = y + b_ref[...]
    y = _apply_act(y, act)
    if residual:
        y = y + r_ref[...].astype(jnp.float32)
    o_ref[...] = y.astype(o_ref.dtype)


def _fused_kernel(*refs, act, norm, residual, inv_hw):
    """One grid step per batch element: matmul (+IN) (+act) (+residual)."""
    p_ref, w_ref = refs[0], refs[1]
    i = 2
    if not norm:
        b_ref = refs[i]; i += 1
    if residual:
        r_ref = refs[i]; i += 1
    o_ref = refs[i]

    y = jnp.dot(p_ref[...], w_ref[...], preferred_element_type=jnp.float32)
    if norm:
        mean = jnp.sum(y, axis=0, keepdims=True) * inv_hw
        ex2 = jnp.sum(y * y, axis=0, keepdims=True) * inv_hw
        var = jnp.maximum(ex2 - mean * mean, 0.0)
        y = (y - mean) * jax.lax.rsqrt(var + EPS)
    else:
        y = y + b_ref[...]
    y = _apply_act(y, act)
    if residual:
        y = y + r_ref[...].astype(jnp.float32)
    o_ref[...] = y.astype(o_ref.dtype)


def _matmul_kernel(*refs, act, norm):
    """Row-tiled matmul.  norm=True: write raw y tile and accumulate per-channel
    sum / sum-of-squares across the HW-tile grid axis ("arbitrary" axis 1)."""
    p_ref, w_ref = refs[0], refs[1]
    i = 2
    if not norm:
        b_ref = refs[i]; i += 1
    y_ref = refs[i]; i += 1

    y = jnp.dot(p_ref[...], w_ref[...], preferred_element_type=jnp.float32)
    if norm:
        s_ref, sq_ref = refs[i], refs[i + 1]

        @pl.when(pl.program_id(1) == 0)
        def _():
            s_ref[...] = jnp.zeros_like(s_ref)
            sq_ref[...] = jnp.zeros_like(sq_ref)

        s_ref[...] += jnp.sum(y, axis=0, keepdims=True)
        sq_ref[...] += jnp.sum(y * y, axis=0, keepdims=True)
    else:
        y = _apply_act(y + b_ref[...], act)
    y_ref[...] = y.astype(y_ref.dtype)


def _norm_act_kernel(*refs, act, residual):
    """Row-tiled InstanceNorm epilogue: (y - mean) * rstd -> act (+ residual)."""
    y_ref, m_ref, rs_ref = refs[0], refs[1], refs[2]
    i = 3
    if residual:
        r_ref = refs[i]; i += 1
    o_ref = refs[i]

    y = (y_ref[...].astype(jnp.float32) - m_ref[...]) * rs_ref[...]
    y = _apply_act(y, act)
    if residual:
        y = y + r_ref[...].astype(jnp.float32)
    o_ref[...] = y.astype(o_ref.dtype)


# ----------------------------------------------------------------------------
# pallas_call wrappers
# ----------------------------------------------------------------------------
def _tap_conv(x_pad, w, b, residual, *, act, norm, out_dtype, Cp, Ho, Wo):
    """Fused single-tile tap-loop conv (stride 1)."""
    N, Hp, Wp, Cin = x_pad.shape
    Cout, _, kh, kw = w.shape
    nrows = Ho * Wp                      # width-padded ("wide") output rows
    lx = Hp * Wp + (kw - 1)              # tail rows keep every tap slice in-bounds
    xw = x_pad.reshape(N, Hp * Wp, Cin)
    xw = jnp.pad(xw, ((0, 0), (0, kw - 1), (0, 0))).astype(jnp.bfloat16)

    wt = w.transpose(2, 3, 1, 0).reshape(kh * kw, Cin, Cout)
    if Cp != Cout:
        wt = jnp.pad(wt, ((0, 0), (0, 0), (0, Cp - Cout)))
    wt = wt.astype(jnp.bfloat16)
    offsets = tuple(dy * Wp + dx for dy in range(kh) for dx in range(kw))
    mask = jnp.tile((jnp.arange(Wp) < Wo).astype(jnp.float32), Ho).reshape(nrows, 1)

    in_specs = [pl.BlockSpec((None, lx, Cin), lambda n: (n, 0, 0)),
                pl.BlockSpec((kh * kw, Cin, Cp), lambda n: (0, 0, 0)),
                pl.BlockSpec((nrows, 1), lambda n: (0, 0))]
    args = [xw, wt, mask]
    if not norm:
        bias = b if Cp == Cout else jnp.pad(b, (0, Cp - Cout))
        in_specs.append(pl.BlockSpec((1, Cp), lambda n: (0, 0)))
        args.append(bias.reshape(1, Cp).astype(jnp.float32))
    if residual is not None:
        r = residual
        if Cp != Cout:
            r = jnp.pad(r, ((0, 0), (0, 0), (0, Cp - Cout)))
        r = r.reshape(N, Ho, Wo, Cp)
        r = jnp.pad(r, ((0, 0), (0, 0), (0, Wp - Wo), (0, 0)))
        r = r.reshape(N, nrows, Cp).astype(jnp.bfloat16)
        in_specs.append(pl.BlockSpec((None, nrows, Cp), lambda n: (n, 0, 0)))
        args.append(r)

    kernel = functools.partial(_tap_conv_kernel, offsets=offsets, nrows=nrows,
                               act=act, norm=norm,
                               residual=residual is not None,
                               inv_cnt=1.0 / (Ho * Wo))
    out = pl.pallas_call(
        kernel,
        out_shape=jax.ShapeDtypeStruct((N, nrows, Cp), out_dtype),
        grid=(N,),
        in_specs=in_specs,
        out_specs=pl.BlockSpec((None, nrows, Cp), lambda n: (n, 0, 0)),
        compiler_params=pltpu.CompilerParams(
            dimension_semantics=("parallel",), vmem_limit_bytes=VMEM_LIMIT),
    )(*args)
    out = out.reshape(N, Ho, Wp, Cp)[:, :, :Wo, :Cout]
    return out.reshape(N, Ho * Wo, Cout)


def _fused_layer(patches, w2d, bias, residual, *, act, norm, out_dtype):
    N, HW, K = patches.shape
    C = w2d.shape[1]
    in_specs = [pl.BlockSpec((None, HW, K), lambda n: (n, 0, 0)),
                pl.BlockSpec((K, C), lambda n: (0, 0))]
    args = [patches, w2d]
    if not norm:
        in_specs.append(pl.BlockSpec((1, C), lambda n: (0, 0)))
        args.append(bias.reshape(1, C))
    if residual is not None:
        in_specs.append(pl.BlockSpec((None, HW, C), lambda n: (n, 0, 0)))
        args.append(residual)
    kernel = functools.partial(_fused_kernel, act=act, norm=norm,
                               residual=residual is not None, inv_hw=1.0 / HW)
    return pl.pallas_call(
        kernel,
        out_shape=jax.ShapeDtypeStruct((N, HW, C), out_dtype),
        grid=(N,),
        in_specs=in_specs,
        out_specs=pl.BlockSpec((None, HW, C), lambda n: (n, 0, 0)),
        compiler_params=pltpu.CompilerParams(
            dimension_semantics=("parallel",),
            vmem_limit_bytes=VMEM_LIMIT),
    )(*args)


def _matmul_tiled(patches, w2d, bias, *, act, norm, out_dtype, tile_hw):
    N, HW, K = patches.shape
    C = w2d.shape[1]
    tile, HWp, T = _row_tiling(HW, tile_hw)
    if HWp != HW:  # zero rows contribute nothing to the IN statistics
        patches = jnp.pad(patches, ((0, 0), (0, HWp - HW), (0, 0)))

    in_specs = [pl.BlockSpec((None, tile, K), lambda b, t: (b, t, 0)),
                pl.BlockSpec((K, C), lambda b, t: (0, 0))]
    args = [patches, w2d]
    if not norm:
        in_specs.append(pl.BlockSpec((1, C), lambda b, t: (0, 0)))
        args.append(bias.reshape(1, C))

    y_spec = pl.BlockSpec((None, tile, C), lambda b, t: (b, t, 0))
    if norm:
        out_shape = (jax.ShapeDtypeStruct((N, HWp, C), out_dtype),
                     jax.ShapeDtypeStruct((N, 1, C), jnp.float32),
                     jax.ShapeDtypeStruct((N, 1, C), jnp.float32))
        out_specs = (y_spec,
                     pl.BlockSpec((None, 1, C), lambda b, t: (b, 0, 0)),
                     pl.BlockSpec((None, 1, C), lambda b, t: (b, 0, 0)))
        dims = ("parallel", "arbitrary")   # stats accumulate across HW tiles
    else:
        out_shape = jax.ShapeDtypeStruct((N, HWp, C), out_dtype)
        out_specs = y_spec
        dims = ("parallel", "parallel")

    out = pl.pallas_call(
        functools.partial(_matmul_kernel, act=act, norm=norm),
        out_shape=out_shape,
        grid=(N, T),
        in_specs=in_specs,
        out_specs=out_specs,
        compiler_params=pltpu.CompilerParams(
            dimension_semantics=dims, vmem_limit_bytes=VMEM_LIMIT),
    )(*args)
    return out if norm else (out,)


def _norm_act(y, mean, rstd, residual, *, act, out_dtype, tile_hw):
    N, HW, C = y.shape
    tile, HWp, T = _row_tiling(HW, tile_hw)
    if HWp != HW:
        y = jnp.pad(y, ((0, 0), (0, HWp - HW), (0, 0)))
        if residual is not None:
            residual = jnp.pad(residual, ((0, 0), (0, HWp - HW), (0, 0)))
    in_specs = [pl.BlockSpec((None, tile, C), lambda b, t: (b, t, 0)),
                pl.BlockSpec((None, 1, C), lambda b, t: (b, 0, 0)),
                pl.BlockSpec((None, 1, C), lambda b, t: (b, 0, 0))]
    args = [y, mean, rstd]
    if residual is not None:
        in_specs.append(pl.BlockSpec((None, tile, C), lambda b, t: (b, t, 0)))
        args.append(residual)
    out = pl.pallas_call(
        functools.partial(_norm_act_kernel, act=act,
                          residual=residual is not None),
        out_shape=jax.ShapeDtypeStruct((N, HWp, C), out_dtype),
        grid=(N, T),
        in_specs=in_specs,
        out_specs=pl.BlockSpec((None, tile, C), lambda b, t: (b, t, 0)),
        compiler_params=pltpu.CompilerParams(
            dimension_semantics=("parallel", "parallel"),
            vmem_limit_bytes=VMEM_LIMIT),
    )(*args)
    return out[:, :HW] if HWp != HW else out


def _layer_dispatch(patches, w2d, bias, residual, *, act, norm, out_dtype,
                    tile_hw):
    N, HW, K = patches.shape
    if HW <= tile_hw:          # whole layer fits one VMEM row tile: fully fused
        return _fused_layer(patches, w2d, bias, residual,
                            act=act, norm=norm, out_dtype=out_dtype)
    if not norm:
        (y,) = _matmul_tiled(patches, w2d, bias, act=act, norm=False,
                             out_dtype=out_dtype, tile_hw=tile_hw)
        return y[:, :HW]
    # two-pass InstanceNorm: row-tiled matmul + stats, then row-tiled normalize
    y, s, sq = _matmul_tiled(patches, w2d, None, act=None, norm=True,
                             out_dtype=jnp.bfloat16, tile_hw=tile_hw)
    mean = s * (1.0 / HW)
    var = jnp.maximum(sq * (1.0 / HW) - mean * mean, 0.0)
    rstd = jax.lax.rsqrt(var + EPS)
    res = residual
    if res is not None and y.shape[1] != HW:
        res = jnp.pad(res, ((0, 0), (0, y.shape[1] - HW), (0, 0)))
    out = _norm_act(y, mean, rstd, res, act=act, out_dtype=out_dtype,
                    tile_hw=tile_hw)
    return out[:, :HW]


# ----------------------------------------------------------------------------
# Plain-JAX glue: padding, im2col (rows layout), conv / conv-transpose wrappers
# ----------------------------------------------------------------------------
def _im2col_nhwc(xp, kh, kw, stride):
    """xp: padded [N, H, W, C] -> ([N, Ho*Wo, kh*kw*C], Ho, Wo); K = (i, j, c)."""
    N, H, W, C = xp.shape
    Ho = (H - kh) // stride + 1
    Wo = (W - kw) // stride + 1
    taps = []
    for i in range(kh):
        for j in range(kw):
            taps.append(xp[:, i:i + stride * (Ho - 1) + 1:stride,
                           j:j + stride * (Wo - 1) + 1:stride, :])
    p = jnp.stack(taps, axis=3)                    # [N, Ho, Wo, kh*kw, C]
    return p.reshape(N, Ho * Wo, kh * kw * C), Ho, Wo


def conv2d_rows(x_rows, H, W, w, b, *, stride=1, pad=0, pad_mode="constant",
                act=None, norm=False, residual=None,
                out_dtype=jnp.bfloat16, tile_hw=None):
    """x_rows: [N, H*W, Cin]; w: [Cout, Cin, kh, kw] (PyTorch OIHW); b: [Cout]."""
    N = x_rows.shape[0]
    Cout, Cin, kh, kw = w.shape
    x = x_rows.reshape(N, H, W, Cin)
    if pad > 0:
        x = jnp.pad(x, ((0, 0), (pad, pad), (pad, pad), (0, 0)), mode=pad_mode)
    Hp, Wp = x.shape[1], x.shape[2]
    Ho = (Hp - kh) // stride + 1
    Wo = (Wp - kw) // stride + 1
    Cp = Cout if Cout >= 64 else 128   # keep output stores lane-dense (tail Cout=3)
    ob = jnp.dtype(out_dtype).itemsize

    # Fast path: stride-1 3x3 conv fully fused with in-kernel tap loop.
    if (stride == 1 and kh * kw <= 9 and Cin >= 16 and
            _tap_fits(Hp * Wp, Ho * Wp, Cin, Cp, kh * kw, ob,
                      residual is not None)):
        out = _tap_conv(x.astype(jnp.bfloat16), w, b, residual, act=act,
                        norm=norm, out_dtype=out_dtype, Cp=Cp, Ho=Ho, Wo=Wo)
        return out, Ho, Wo

    # Fallback: im2col + (fused | two-pass row-tiled) matmul path.
    patches, Ho, Wo = _im2col_nhwc(x, kh, kw, stride)
    patches = patches.astype(jnp.bfloat16)

    w2d = w.transpose(2, 3, 1, 0).reshape(kh * kw * Cin, Cout)  # (i, j, ci) rows
    if Cp != Cout:
        w2d = jnp.pad(w2d, ((0, 0), (0, Cp - Cout)))
        if b is not None:
            b = jnp.pad(b, (0, Cp - Cout))
    w2d = w2d.astype(jnp.bfloat16)
    bias = None if norm else b.astype(jnp.float32)

    K = kh * kw * Cin
    tile = tile_hw if tile_hw is not None else _auto_tile(Ho * Wo, K, Cp, ob)
    out = _layer_dispatch(patches, w2d, bias, residual, act=act, norm=norm,
                          out_dtype=out_dtype, tile_hw=tile)
    if Cp != Cout:
        out = out[:, :, :Cout]
    return out, Ho, Wo


# ConvTranspose2d(k=3, stride=2, pad=1, output_padding=1):
#   out[2m+py, 2n+px] = sum_{dy,dx} x[m+dy, n+dx] . w[:, :, T[py,dy], T[px,dx]]
# and only the (parity, offset) pairs below ever touch a real (non-zero-inserted)
# input sample.
_TCONV_TAP = {(0, 0): 1, (1, 0): 2, (1, 1): 0}


def conv_transpose2d_rows(x_rows, H, W, w, b, *, act, out_dtype=jnp.bfloat16,
                          tile_hw=None):
    """x_rows: [N, H*W, Cin]; w: [Cin, Cout, 3, 3] (PyTorch ConvTranspose2d).
    Phase-decomposed lowering (no zero insertion).  The bias `b` is ignored
    because the following InstanceNorm cancels it exactly."""
    del b
    N = x_rows.shape[0]
    Cin, Cout = w.shape[0], w.shape[1]
    x = x_rows.reshape(N, H, W, Cin)
    xp = jnp.pad(x, ((0, 0), (0, 1), (0, 1), (0, 0)))        # high-side halo
    patches, _, _ = _im2col_nhwc(xp, 2, 2, 1)                # [N, H*W, 4*Cin]
    patches = patches.astype(jnp.bfloat16)

    wc = jnp.zeros((2, 2, Cin, 2, 2, Cout), jnp.float32)     # (dy,dx,ci,py,px,co)
    for py in (0, 1):
        for px in (0, 1):
            for dy in (0, 1):
                for dx in (0, 1):
                    if (py, dy) in _TCONV_TAP and (px, dx) in _TCONV_TAP:
                        wc = wc.at[dy, dx, :, py, px, :].set(
                            w[:, :, _TCONV_TAP[(py, dy)], _TCONV_TAP[(px, dx)]])
    K, C4 = 4 * Cin, 4 * Cout
    w2d = wc.reshape(K, C4).astype(jnp.bfloat16)

    HW = H * W
    tile = tile_hw if tile_hw is not None else _auto_tile(HW, K, C4, 2)

    y, s, sq = _matmul_tiled(patches, w2d, None, act=None, norm=True,
                             out_dtype=jnp.bfloat16, tile_hw=tile)
    # combine per-(phase, channel) statistics into per-channel statistics
    cnt = 4.0 * HW
    s_c = s.reshape(N, 4, Cout).sum(axis=1).reshape(N, 1, Cout)
    sq_c = sq.reshape(N, 4, Cout).sum(axis=1).reshape(N, 1, Cout)
    mean = s_c / cnt
    var = jnp.maximum(sq_c / cnt - mean * mean, 0.0)
    rstd = jax.lax.rsqrt(var + EPS)
    # normalize in the lane-dense phase-major layout [HW, 4*Cout]
    mean4 = jnp.tile(mean, (1, 1, 4))
    rstd4 = jnp.tile(rstd, (1, 1, 4))
    yn = _norm_act(y, mean4, rstd4, None, act=act, out_dtype=out_dtype,
                   tile_hw=tile)
    yn = yn[:, :HW]
    # interleave the four phases into the 2x-upsampled rows layout (XLA glue;
    # fuses with the next layer's pad / im2col reshapes)
    out = yn.reshape(N, H, W, 2, 2, Cout).transpose(0, 1, 3, 2, 4, 5)
    out = out.reshape(N, 4 * HW, Cout)
    return out, 2 * H, 2 * W


# ----------------------------------------------------------------------------
# Parameters (deterministic synthetic init) and Generator forward
# ----------------------------------------------------------------------------
def init_params(key):
    params = {}

    def conv_p(k, cout, cin, ksz):
        k1, k2 = jax.random.split(k)
        fan_in = cin * ksz * ksz
        w = jax.random.normal(k1, (cout, cin, ksz, ksz), jnp.float32) / jnp.sqrt(fan_in)
        b = 0.01 * jax.random.normal(k2, (cout,), jnp.float32)
        return w, b

    def convt_p(k, cin, cout, ksz):
        k1, k2 = jax.random.split(k)
        fan_in = cin * ksz * ksz
        w = jax.random.normal(k1, (cin, cout, ksz, ksz), jnp.float32) / jnp.sqrt(fan_in)
        b = 0.01 * jax.random.normal(k2, (cout,), jnp.float32)
        return w, b

    keys = jax.random.split(key, 6 + 2 * N_RB)
    ki = iter(keys)

    params["c1_w"], params["c1_b"] = conv_p(next(ki), N_GF, 3, 7)
    params["c2_w"], params["c2_b"] = conv_p(next(ki), 2 * N_GF, N_GF, 3)
    params["c3_w"], params["c3_b"] = conv_p(next(ki), 4 * N_GF, 2 * N_GF, 3)
    for i in range(N_RB):
        params[f"rb{i}_w1"], params[f"rb{i}_b1"] = conv_p(next(ki), 4 * N_GF, 4 * N_GF, 3)
        params[f"rb{i}_w2"], params[f"rb{i}_b2"] = conv_p(next(ki), 4 * N_GF, 4 * N_GF, 3)
    params["u1_w"], params["u1_b"] = convt_p(next(ki), 4 * N_GF, 2 * N_GF, 3)
    params["u2_w"], params["u2_b"] = convt_p(next(ki), 2 * N_GF, N_GF, 3)
    params["c4_w"], params["c4_b"] = conv_p(next(ki), 3, N_GF, 7)
    return params


def generator_forward(params, x, tile_hw=None):
    """x: [N, 3, H, W] (NCHW, f32) -> [N, 3, H, W] (f32)."""
    p = params
    N, Cin, H, W = x.shape
    rows = x.transpose(0, 2, 3, 1).reshape(N, H * W, Cin).astype(jnp.bfloat16)

    # Head: ReflectionPad(3) + Conv7x7 + IN + ReLU
    rows, H, W = conv2d_rows(rows, H, W, p["c1_w"], p["c1_b"], stride=1, pad=3,
                             pad_mode="reflect", act="relu", norm=True,
                             tile_hw=tile_hw)
    # Two stride-2 downsampling convs
    rows, H, W = conv2d_rows(rows, H, W, p["c2_w"], p["c2_b"], stride=2, pad=1,
                             act="relu", norm=True, tile_hw=tile_hw)
    rows, H, W = conv2d_rows(rows, H, W, p["c3_w"], p["c3_b"], stride=2, pad=1,
                             act="relu", norm=True, tile_hw=tile_hw)
    # 6 residual blocks (stride-1 3x3: fused tap-loop conv + IN + act + skip)
    for i in range(N_RB):
        skip = rows
        h1, _, _ = conv2d_rows(rows, H, W, p[f"rb{i}_w1"], p[f"rb{i}_b1"],
                               stride=1, pad=1, pad_mode="reflect",
                               act="relu", norm=True, tile_hw=tile_hw)
        rows, _, _ = conv2d_rows(h1, H, W, p[f"rb{i}_w2"], p[f"rb{i}_b2"],
                                 stride=1, pad=1, pad_mode="reflect",
                                 act=None, norm=True, residual=skip,
                                 tile_hw=tile_hw)
    # Two stride-2 transposed-conv upsamplers (phase-decomposed, IN + ReLU)
    rows, H, W = conv_transpose2d_rows(rows, H, W, p["u1_w"], p["u1_b"],
                                       act="relu", tile_hw=tile_hw)
    rows, H, W = conv_transpose2d_rows(rows, H, W, p["u2_w"], p["u2_b"],
                                       act="relu", tile_hw=tile_hw)
    # Tail: ReflectionPad(3) + Conv7x7 + Tanh
    rows, H, W = conv2d_rows(rows, H, W, p["c4_w"], p["c4_b"], stride=1, pad=3,
                             pad_mode="reflect", act="tanh", norm=False,
                             out_dtype=jnp.float32, tile_hw=tile_hw)
    return rows.reshape(N, H, W, 3).transpose(0, 3, 1, 2)


# ----------------------------------------------------------------------------
# XLA references for self-checks
# ----------------------------------------------------------------------------
def _ref_instance_norm(y):
    mean = jnp.mean(y, axis=(1, 2), keepdims=True)
    var = jnp.mean(jnp.square(y - mean), axis=(1, 2), keepdims=True)
    return (y - mean) * jax.lax.rsqrt(var + EPS)


def _ref_conv2d(x, w, b, stride, pad, pad_mode):
    if pad > 0:
        x = jnp.pad(x, ((0, 0), (pad, pad), (pad, pad), (0, 0)), mode=pad_mode)
    w_hwio = jnp.transpose(w, (2, 3, 1, 0))
    y = jax.lax.conv_general_dilated(
        x, w_hwio, (stride, stride), "VALID",
        dimension_numbers=("NHWC", "HWIO", "NHWC"))
    return y + b.reshape(1, 1, 1, -1)


def _ref_conv_transpose2d(x, w, b):
    # stride=2, padding=1, output_padding=1, k=3
    w_hwio = jnp.transpose(jnp.flip(w, (2, 3)), (2, 3, 0, 1))
    y = jax.lax.conv_general_dilated(
        x, w_hwio, (1, 1), ((1, 2), (1, 2)), lhs_dilation=(2, 2),
        dimension_numbers=("NHWC", "HWIO", "NHWC"))
    return y + b.reshape(1, 1, 1, -1)


def _check_conv(key, N, H, W, Cin, Cout, ksz, tile_hw, tag):
    k1, k2, k3 = jax.random.split(key, 3)
    pad = ksz // 2
    x = jax.random.normal(k1, (N, H, W, Cin), jnp.float32)
    w = jax.random.normal(k2, (Cout, Cin, ksz, ksz), jnp.float32) / math.sqrt(Cin * ksz * ksz)
    b = 0.1 * jax.random.normal(k3, (Cout,), jnp.float32)
    xb = x.astype(jnp.bfloat16)

    def run(xr, w_, b_):
        out, Ho, Wo = conv2d_rows(xr.reshape(N, H * W, Cin), H, W, w_, b_,
                                  stride=1, pad=pad, pad_mode="reflect",
                                  act="relu", norm=True,
                                  out_dtype=jnp.float32, tile_hw=tile_hw)
        return out.reshape(N, Ho, Wo, Cout)

    got = jax.jit(run)(xb, w, b)
    wq = w.astype(jnp.bfloat16).astype(jnp.float32)
    ref = jnp.maximum(_ref_instance_norm(
        _ref_conv2d(xb.astype(jnp.float32), wq, b, 1, pad, "reflect")), 0.0)
    err = float(jnp.max(jnp.abs(got - ref)))
    assert err < 5e-2, f"{tag}: max|err|={err}"


def _check_tap(key, N, H, W, Cin, Cout, with_res, tag):
    k1, k2, k3, k4 = jax.random.split(key, 4)
    x = jax.random.normal(k1, (N, H, W, Cin), jnp.float32)
    w = jax.random.normal(k2, (Cout, Cin, 3, 3), jnp.float32) / math.sqrt(Cin * 9)
    b = 0.1 * jax.random.normal(k3, (Cout,), jnp.float32)
    res = jax.random.normal(k4, (N, H, W, Cout), jnp.float32) if with_res else None
    xb = x.astype(jnp.bfloat16)
    resb = res.astype(jnp.bfloat16) if with_res else None
    act = None if with_res else "relu"

    def run(xr, w_, b_, r_):
        rr = None if r_ is None else r_.reshape(N, H * W, Cout)
        out, Ho, Wo = conv2d_rows(xr.reshape(N, H * W, Cin), H, W, w_, b_,
                                  stride=1, pad=1, pad_mode="reflect",
                                  act=act, norm=True, residual=rr,
                                  out_dtype=jnp.float32)
        return out.reshape(N, Ho, Wo, Cout)

    got = jax.jit(run)(xb, w, b, resb)
    wq = w.astype(jnp.bfloat16).astype(jnp.float32)
    ref = _ref_instance_norm(
        _ref_conv2d(xb.astype(jnp.float32), wq, b, 1, 1, "reflect"))
    if act == "relu":
        ref = jnp.maximum(ref, 0.0)
    if with_res:
        ref = ref + resb.astype(jnp.float32)
    err = float(jnp.max(jnp.abs(got - ref)))
    assert err < 5e-2, f"{tag}: max|err|={err}"


def _check_convt(key, N, H, W, Cin, Cout, tile_hw, tag):
    k1, k2, k3 = jax.random.split(key, 3)
    x = jax.random.normal(k1, (N, H, W, Cin), jnp.float32)
    w = jax.random.normal(k2, (Cin, Cout, 3, 3), jnp.float32) / math.sqrt(Cin * 9)
    b = 0.1 * jax.random.normal(k3, (Cout,), jnp.float32)
    xb = x.astype(jnp.bfloat16)

    def run(xr, w_):
        out, Ho, Wo = conv_transpose2d_rows(xr.reshape(N, H * W, Cin), H, W,
                                            w_, b, act="relu",
                                            out_dtype=jnp.float32,
                                            tile_hw=tile_hw)
        return out.reshape(N, Ho, Wo, Cout)

    got = jax.jit(run)(xb, w)
    wq = w.astype(jnp.bfloat16).astype(jnp.float32)
    ref = jnp.maximum(_ref_instance_norm(
        _ref_conv_transpose2d(xb.astype(jnp.float32), wq, b)), 0.0)
    err = float(jnp.max(jnp.abs(got - ref)))
    assert err < 5e-2, f"{tag}: max|err|={err}"


if __name__ == "__main__":
    key = jax.random.PRNGKey(0)
    kp, kx, kc = jax.random.split(key, 3)
    kc1, kc2, kc3, kc4, kc5, kc6 = jax.random.split(kc, 6)

    # Self-checks against XLA references (bf16-matched inputs):
    #  - im2col two-pass tiled IN path (HW=1024 > 512 -> 2 row tiles)
    #  - im2col fully fused single-tile path
    #  - tap-loop fused conv path (relu / residual variants)
    #  - phase-decomposed ConvTranspose path (single-tile and multi-tile stats)
    _check_conv(kc1, 1, 32, 32, 3, 64, 7, tile_hw=512, tag="conv-im2col-tiled")
    _check_conv(kc2, 2, 16, 16, 3, 64, 7, tile_hw=512, tag="conv-im2col-fused")
    _check_tap(kc3, 2, 12, 12, 32, 64, with_res=False, tag="tapconv-relu")
    _check_tap(kc4, 2, 12, 12, 32, 64, with_res=True, tag="tapconv-residual")
    _check_convt(kc5, 1, 4, 4, 4 * N_GF, 2 * N_GF, tile_hw=None, tag="convt-fused")
    _check_convt(kc6, 1, 8, 8, 2 * N_GF, N_GF, tile_hw=32, tag="convt-tiled")

    # Full Generator forward at a small NCHW test shape.
    params = init_params(kp)
    x = jax.random.normal(kx, (2, 3, 16, 16), jnp.float32)
    fwd = jax.jit(generator_forward)
    y = fwd(params, x)
    jax.block_until_ready(y)

    assert y.shape == (2, 3, 16, 16), y.shape
    assert bool(jnp.all(jnp.isfinite(y)))
    assert bool(jnp.all(jnp.abs(y) <= 1.0 + 1e-6))  # tanh output range
    print("KERNEL_OK")
</pallas_src>

<mosaic_0001>
module attributes {stable_mosaic.version = 11 : i64} {
  func.func @_matmul_kernel(%arg0: i32, %arg1: i32, %arg2: memref<1x512x147xbf16, #tpu.memory_space<vmem>>, %arg3: memref<147x64xbf16, #tpu.memory_space<vmem>>, %arg4: memref<1x512x64xbf16, #tpu.memory_space<vmem>>, %arg5: memref<1x1x64xf32, #tpu.memory_space<vmem>>, %arg6: memref<1x1x64xf32, #tpu.memory_space<vmem>>) attributes {dimension_semantics = [#tpu.dimension_semantics<parallel>, #tpu.dimension_semantics<arbitrary>], iteration_bounds = array<i64: 1, 2>, scalar_prefetch = 0 : i64, scratch_operands = 0 : i64, tpu.core_type = #tpu.core_type<tc>, window_params = [{transform_indices = @transform_0, window_bounds = array<i64: 1, 512, 147>}, {pipeline_mode = #tpu.pipeline_mode<synchronous>, transform_indices = @transform_1, window_bounds = array<i64: 147, 64>}, {transform_indices = @transform_2, window_bounds = array<i64: 1, 512, 64>}, {transform_indices = @transform_3, window_bounds = array<i64: 1, 1, 64>}, {transform_indices = @transform_4, window_bounds = array<i64: 1, 1, 64>}]} {
    %c0 = arith.constant 0 : index
    %c0_0 = arith.constant 0 : index
    %c0_1 = arith.constant 0 : index
    %0 = vector.load %arg2[%c0, %c0_0, %c0_1] : memref<1x512x147xbf16, #tpu.memory_space<vmem>>, vector<1x512x147xbf16>
    %1 = vector.shape_cast %0 : vector<1x512x147xbf16> to vector<512x147xbf16>
    %c0_2 = arith.constant 0 : index
    %c0_3 = arith.constant 0 : index
    %2 = vector.load %arg3[%c0_2, %c0_3] : memref<147x64xbf16, #tpu.memory_space<vmem>>, vector<147x64xbf16>
    %cst = arith.constant dense<0.000000e+00> : vector<512x64xf32>
    %3 = tpu.matmul %1, %2, %cst {dimension_numbers = #tpu.dot_dimension_numbers<[1], [0], [0], [1], [0, 0, 1, 1], [], []>} : vector<512x147xbf16>, vector<147x64xbf16>, vector<512x64xf32> -> vector<512x64xf32>
    %c0_i32 = arith.constant 0 : i32
    %4 = arith.cmpi eq, %arg1, %c0_i32 : i32
    %5 = arith.extui %4 : i1 to i32
    %c0_i32_4 = arith.constant 0 : i32
    %6 = arith.cmpi ne, %5, %c0_i32_4 : i32
    scf.if %6 {
      %cst_22 = arith.constant 0.000000e+00 : f32
      %28 = vector.broadcast %cst_22 : f32 to vector<1x64xf32>
      %c0_23 = arith.constant 0 : index
      %c0_24 = arith.constant 0 : index
      %c0_25 = arith.constant 0 : index
      %29 = vector.load %arg5[%c0_23, %c0_24, %c0_25] : memref<1x1x64xf32, #tpu.memory_space<vmem>>, vector<1x1x64xf32>
      %30 = vector.shape_cast %29 : vector<1x1x64xf32> to vector<1x64xf32>
      %31 = vector.shape_cast %28 : vector<1x64xf32> to vector<1x1x64xf32>
      tpu.vector_store %arg5[%c0_23, %c0_24, %c0_25], %31 {strides = array<i32>} : memref<1x1x64xf32, #tpu.memory_space<vmem>>, vector<1x1x64xf32>,
      %cst_26 = arith.constant 0.000000e+00 : f32
      %32 = vector.broadcast %cst_26 : f32 to vector<1x64xf32>
      %c0_27 = arith.constant 0 : index
      %c0_28 = arith.constant 0 : index
      %c0_29 = arith.constant 0 : index
      %33 = vector.load %arg6[%c0_27, %c0_28, %c0_29] : memref<1x1x64xf32, #tpu.memory_space<vmem>>, vector<1x1x64xf32>
      %34 = vector.shape_cast %33 : vector<1x1x64xf32> to vector<1x64xf32>
      %35 = vector.shape_cast %32 : vector<1x64xf32> to vector<1x1x64xf32>
      tpu.vector_store %arg6[%c0_27, %c0_28, %c0_29], %35 {strides = array<i32>} : memref<1x1x64xf32, #tpu.memory_space<vmem>>, vector<1x1x64xf32>,
    } else {
    }
    %c0_5 = arith.constant 0 : index
    %c0_6 = arith.constant 0 : index
    %c0_7 = arith.constant 0 : index
    %7 = vector.load %arg5[%c0_5, %c0_6, %c0_7] : memref<1x1x64xf32, #tpu.memory_space<vmem>>, vector<1x1x64xf32>
    %8 = vector.shape_cast %7 : vector<1x1x64xf32> to vector<1x64xf32>
    %cst_8 = arith.constant dense<0.000000e+00> : vector<64xf32>
    %9 = vector.multi_reduction <add>, %3, %cst_8 [0] : vector<512x64xf32> to vector<64xf32>
    %10 = vector.shape_cast %9 : vector<64xf32> to vector<1x64xf32>
    %11 = arith.addf %8, %10 : vector<1x64xf32>
    %c0_9 = arith.constant 0 : index
    %c0_10 = arith.constant 0 : index
    %c0_11 = arith.constant 0 : index
    %12 = vector.load %arg5[%c0_9, %c0_10, %c0_11] : memref<1x1x64xf32, #tpu.memory_space<vmem>>, vector<1x1x64xf32>
    %13 = vector.shape_cast %12 : vector<1x1x64xf32> to vector<1x64xf32>
    %14 = vector.shape_cast %11 : vector<1x64xf32> to vector<1x1x64xf32>
    tpu.vector_store %arg5[%c0_9, %c0_10, %c0_11], %14 {strides = array<i32>} : memref<1x1x64xf32, #tpu.memory_space<vmem>>, vector<1x1x64xf32>,
    %c0_12 = arith.constant 0 : index
    %c0_13 = arith.constant 0 : index
    %c0_14 = arith.constant 0 : index
    %15 = vector.load %arg6[%c0_12, %c0_13, %c0_14] : memref<1x1x64xf32, #tpu.memory_space<vmem>>, vector<1x1x64xf32>
    %16 = vector.shape_cast %15 : vector<1x1x64xf32> to vector<1x64xf32>
    %17 = arith.mulf %3, %3 : vector<512x64xf32>
    %cst_15 = arith.constant dense<0.000000e+00> : vector<64xf32>
    %18 = vector.multi_reduction <add>, %17, %cst_15 [0] : vector<512x64xf32> to vector<64xf32>
    %19 = vector.shape_cast %18 : vector<64xf32> to vector<1x64xf32>
    %20 = arith.addf %16, %19 : vector<1x64xf32>
    %c0_16 = arith.constant 0 : index
    %c0_17 = arith.constant 0 : index
    %c0_18 = arith.constant 0 : index
    %21 = vector.load %arg6[%c0_16, %c0_17, %c0_18] : memref<1x1x64xf32, #tpu.memory_space<vmem>>, vector<1x1x64xf32>
    %22 = vector.shape_cast %21 : vector<1x1x64xf32> to vector<1x64xf32>
    %23 = vector.shape_cast %20 : vector<1x64xf32> to vector<1x1x64xf32>
    tpu.vector_store %arg6[%c0_16, %c0_17, %c0_18], %23 {strides = array<i32>} : memref<1x1x64xf32, #tpu.memory_space<vmem>>, vector<1x1x64xf32>,
    %24 = arith.truncf %3 : vector<512x64xf32> to vector<512x64xbf16>
    %c0_19 = arith.constant 0 : index
    %c0_20 = arith.constant 0 : index
    %c0_21 = arith.constant 0 : index
    %25 = vector.load %arg4[%c0_19, %c0_20, %c0_21] : memref<1x512x64xbf16, #tpu.memory_space<vmem>>, vector<1x512x64xbf16>
    %26 = vector.shape_cast %25 : vector<1x512x64xbf16> to vector<512x64xbf16>
    %27 = vector.shape_cast %24 : vector<512x64xbf16> to vector<1x512x64xbf16>
    tpu.vector_store %arg4[%c0_19, %c0_20, %c0_21], %27 {strides = array<i32>} : memref<1x512x64xbf16, #tpu.memory_space<vmem>>, vector<1x512x64xbf16>,
    return
  }
  func.func @transform_0(%arg0: i32, %arg1: i32) -> (i32, i32, i32) {
    %c0_i32 = arith.constant 0 : i32
    %c0_i32_0 = arith.constant 0 : i32
    return %arg0, %arg1, %c0_i32 : i32, i32, i32
  }
  func.func @transform_1(%arg0: i32, %arg1: i32) -> (i32, i32) {
    %c0_i32 = arith.constant 0 : i32
    %c0_i32_0 = arith.constant 0 : i32
    %c0_i32_1 = arith.constant 0 : i32
    return %c0_i32, %c0_i32_0 : i32, i32
  }
  func.func @transform_2(%arg0: i32, %arg1: i32) -> (i32, i32, i32) {
    %c0_i32 = arith.constant 0 : i32
    %c0_i32_0 = arith.constant 0 : i32
    return %arg0, %arg1, %c0_i32 : i32, i32, i32
  }
  func.func @transform_3(%arg0: i32, %arg1: i32) -> (i32, i32, i32) {
    %c0_i32 = arith.constant 0 : i32
    %c0_i32_0 = arith.constant 0 : i32
    %c0_i32_1 = arith.constant 0 : i32
    return %arg0, %c0_i32, %c0_i32_0 : i32, i32, i32
  }
  func.func @transform_4(%arg0: i32, %arg1: i32) -> (i32, i32, i32) {
    %c0_i32 = arith.constant 0 : i32
    %c0_i32_0 = arith.constant 0 : i32
    %c0_i32_1 = arith.constant 0 : i32
    return %arg0, %c0_i32, %c0_i32_0 : i32, i32, i32
  }
}

module attributes {stable_mosaic.version = 11 : i64} {
  func.func @_norm_act_kernel(%arg0: i32, %arg1: i32, %arg2: memref<1x512x64xbf16, #tpu.memory_space<vmem>>, %arg3: memref<1x1x64xf32, #tpu.memory_space<vmem>>, %arg4: memref<1x1x64xf32, #tpu.memory_space<vmem>>, %arg5: memref<1x512x64xf32, #tpu.memory_space<vmem>>) attributes {dimension_semantics = [#tpu.dimension_semantics<parallel>, #tpu.dimension_semantics<parallel>], iteration_bounds = array<i64: 1, 2>, scalar_prefetch = 0 : i64, scratch_operands = 0 : i64, tpu.core_type = #tpu.core_type<tc>, window_params = [{transform_indices = @transform_0, window_bounds = array<i64: 1, 512, 64>}, {transform_indices = @transform_1, window_bounds = array<i64: 1, 1, 64>}, {transform_indices = @transform_2, window_bounds = array<i64: 1, 1, 64>}, {transform_indices = @transform_3, window_bounds = array<i64: 1, 512, 64>}]} {
    %c0 = arith.constant 0 : index
    %c0_0 = arith.constant 0 : index
    %c0_1 = arith.constant 0 : index
    %0 = vector.load %arg2[%c0, %c0_0, %c0_1] : memref<1x512x64xbf16, #tpu.memory_space<vmem>>, vector<1x512x64xbf16>
    %1 = vector.shape_cast %0 : vector<1x512x64xbf16> to vector<512x64xbf16>
    %2 = arith.extf %1 : vector<512x64xbf16> to vector<512x64xf32>
    %c0_2 = arith.constant 0 : index
    %c0_3 = arith.constant 0 : index
    %c0_4 = arith.constant 0 : index
    %3 = vector.load %arg3[%c0_2, %c0_3, %c0_4] : memref<1x1x64xf32, #tpu.memory_space<vmem>>, vector<1x1x64xf32>
    %4 = vector.shape_cast %3 : vector<1x1x64xf32> to vector<1x64xf32>
    %5 = vector.broadcast %4 : vector<1x64xf32> to vector<512x64xf32>
    %6 = arith.subf %2, %5 : vector<512x64xf32>
    %c0_5 = arith.constant 0 : index
    %c0_6 = arith.constant 0 : index
    %c0_7 = arith.constant 0 : index
    %7 = vector.load %arg4[%c0_5, %c0_6, %c0_7] : memref<1x1x64xf32, #tpu.memory_space<vmem>>, vector<1x1x64xf32>
    %8 = vector.shape_cast %7 : vector<1x1x64xf32> to vector<1x64xf32>
    %9 = vector.broadcast %8 : vector<1x64xf32> to vector<512x64xf32>
    %10 = arith.mulf %6, %9 : vector<512x64xf32>
    %cst = arith.constant 0.000000e+00 : f32
    %11 = vector.broadcast %cst : f32 to vector<512x64xf32>
    %12 = arith.maximumf %10, %11 : vector<512x64xf32>
    %c0_8 = arith.constant 0 : index
    %c0_9 = arith.constant 0 : index
    %c0_10 = arith.constant 0 : index
    %13 = vector.load %arg5[%c0_8, %c0_9, %c0_10] : memref<1x512x64xf32, #tpu.memory_space<vmem>>, vector<1x512x64xf32>
    %14 = vector.shape_cast %13 : vector<1x512x64xf32> to vector<512x64xf32>
    %15 = vector.shape_cast %12 : vector<512x64xf32> to vector<1x512x64xf32>
    tpu.vector_store %arg5[%c0_8, %c0_9, %c0_10], %15 {strides = array<i32>} : memref<1x512x64xf32, #tpu.memory_space<vmem>>, vector<1x512x64xf32>,
    return
  }
  func.func @transform_0(%arg0: i32, %arg1: i32) -> (i32, i32, i32) {
    %c0_i32 = arith.constant 0 : i32
    %c0_i32_0 = arith.constant 0 : i32
    return %arg0, %arg1, %c0_i32 : i32, i32, i32
  }
  func.func @transform_1(%arg0: i32, %arg1: i32) -> (i32, i32, i32) {
    %c0_i32 = arith.constant 0 : i32
    %c0_i32_0 = arith.constant 0 : i32
    %c0_i32_1 = arith.constant 0 : i32
    return %arg0, %c0_i32, %c0_i32_0 : i32, i32, i32
  }
  func.func @transform_2(%arg0: i32, %arg1: i32) -> (i32, i32, i32) {
    %c0_i32 = arith.constant 0 : i32
    %c0_i32_0 = arith.constant 0 : i32
    %c0_i32_1 = arith.constant 0 : i32
    return %arg0, %c0_i32, %c0_i32_0 : i32, i32, i32
  }
  func.func @transform_3(%arg0: i32, %arg1: i32) -> (i32, i32, i32) {
    %c0_i32 = arith.constant 0 : i32
    %c0_i32_0 = arith.constant 0 : i32
    return %arg0, %arg1, %c0_i32 : i32, i32, i32
  }
}

</mosaic_0001>

<llo_original>
// kernel: run.3
$region0: #{run.3}
  #allocation0 [shape = 'u32[]', space=smem, size = 0x4, offset = 0x4, fixed_abs, tag = 'smem constant byte address 0x4 - core index']
  #allocation1 [shape = 'u32[144,128]{1,0:T(1,128)}', space=vmem, size = 0x12000, scoped, tag = 'internal scratch']
  %s0 = inlined_call_operand.vmem [shape: bf16[1,1024,64], index: 0, kind: input, shape index: {}]
  %s1 = inlined_call_operand.vmem [shape: f32[1,1,64], index: 1, kind: input, shape index: {}]
  %s2 = inlined_call_operand.vmem [shape: f32[1,1,64], index: 2, kind: input, shape index: {}]
  %s3 = inlined_call_operand.hbm [shape: f32[1,1024,64], index: 3, kind: output, shape index: {}]
  %s4 = sld [smem:[#allocation0]]
  $region45: #{run.3} parent=0
    _
  %s6 = ssub.s32 1, %s4
  %s7 = scalar_select 0, %s6, %s4
  $region1: #{run.3} parent=0
    #allocation2 [shape = 'u8[524288]{0}', space=vmem, size = 0x80000, scoped, tag = 'output window, operand 0']
    #allocation3 [shape = 's32[2]{0}', space=sflag, size = 0x8, scoped, tag = 'scoped memory for run.3']
    %8 = vsyncpa [#allocation3], 0
    %s9 = scalar_lea.sflag [#allocation3], 1
    %10 = vsyncpa %s9, 0
    loop: start=0, step=1, limit=4
    $region2: #{run.3} parent=1 // loop_pre_header
      _
    $region3: #{run.3} parent=1 // loop_header
      %s12 = sphi 0, %s16
      %p13 = scmp.ge.s32.totalorder %s12, 4
      %s19 = sphi 0, %s31
      %s20 = sphi 0, %s27
      %s21 = sphi 0, %s19
      %s22 = sphi 0, %s20
      %s23 = sphi 0, %s21
      %s24 = sphi 0, %s22
      %s36 = sphi 0, %s38
      %s39 = sphi 0, %s36
      %s40 = sphi 0, %s39
      %s56 = sphi 0, %s40
      %s62 = sphi 0, %s64
      %s65 = sphi 0, %s62
      %s66 = sphi 0, %s65
      %s82 = sphi 0, %s66
      %s88 = sphi 0, %s90
      %s91 = sphi 0, %s88
      %s92 = sphi 0, %s91
      %s108 = sphi 0, %s92
      %s116 = sphi 0, %s118
      %s119 = sphi 0, %s116
      %s120 = sphi 0, %s119
      %s136 = sphi 0, %s120
    $region4: #{run.3} parent=1 // loop_header_branch
      %15 = sbr.rel (%p13) target = $region8
    $region5: #{run.3} parent=1 // loop_body
      %s17 = ssub.s32 %s12, 1
      %s18 = ssub.s32 %s12, 2
      %s25 = sadd.s32 1, %s20
      %p26 = scmp.ge.s32.totalorder %s25, 2
      %s27 = scalar_select %p26, 0, %s25
      %s28 = sadd.s32 1, %s19
      %s29 = scalar_select %p26, %s28, %s19
      %p30 = scmp.ge.s32.totalorder %s29, 1
      %s31 = scalar_select %p30, 0, %s29
      %s32 = ssub.s32 %s19, %s31
      %s33 = ssub.s32 %s20, %s27
      %s34 = sor.u32 %s32, %s33
      %p35 = scmp.eq.s32.totalorder %s34, 0
      %s37 = sadd.s32 %s36, 1
      %s38 = scalar_select %p35, %s36, %s37
      %p41 = pneg %p35
      %p42 = scmp.eq.s32.totalorder %s12, 1
      %p43 = por %p41, %p42
      %p44 = scmp.ne.s32.totalorder %s36, %s39
      %p45 = scmp.eq.s32.totalorder %s12, 0
      %p46 = por %p44, %p45
      %p47 = scmp.ne.s32.totalorder %s36, %s39
      %p48 = scmp.eq.s32.totalorder %s17, 1
      %p49 = por %p47, %p48
      %p50 = scmp.ne.s32.totalorder %s39, %s40
      %p51 = scmp.eq.s32.totalorder %s17, 0
      %p52 = por %p50, %p51
      %p53 = scmp.ne.s32.totalorder %s39, %s40
      %p54 = scmp.eq.s32.totalorder %s18, 1
      %p55 = por %p53, %p54
      %p57 = scmp.ne.s32.totalorder %s40, %s56
      %p58 = scmp.eq.s32.totalorder %s18, 0
      %p59 = por %p57, %p58
      %s60 = ssub.s32 %s19, %s31
      %p61 = scmp.eq.s32.totalorder %s60, 0
      %s63 = sadd.s32 %s62, 1
      %s64 = scalar_select %p61, %s62, %s63
      %p67 = pneg %p61
      %p68 = scmp.eq.s32.totalorder %s12, 1
      %p69 = por %p67, %p68
      %p70 = scmp.ne.s32.totalorder %s62, %s65
      %p71 = scmp.eq.s32.totalorder %s12, 0
      %p72 = por %p70, %p71
      %p73 = scmp.ne.s32.totalorder %s62, %s65
      %p74 = scmp.eq.s32.totalorder %s17, 1
      %p75 = por %p73, %p74
      %p76 = scmp.ne.s32.totalorder %s65, %s66
      %p77 = scmp.eq.s32.totalorder %s17, 0
      %p78 = por %p76, %p77
      %p79 = scmp.ne.s32.totalorder %s65, %s66
      %p80 = scmp.eq.s32.totalorder %s18, 1
      %p81 = por %p79, %p80
      %p83 = scmp.ne.s32.totalorder %s66, %s82
      %p84 = scmp.eq.s32.totalorder %s18, 0
      %p85 = por %p83, %p84
      %s86 = ssub.s32 %s19, %s31
      %p87 = scmp.eq.s32.totalorder %s86, 0
      %s89 = sadd.s32 %s88, 1
      %s90 = scalar_select %p87, %s88, %s89
      %p93 = pneg %p87
      %p94 = scmp.eq.s32.totalorder %s12, 1
      %p95 = por %p93, %p94
      %p96 = scmp.ne.s32.totalorder %s88, %s91
      %p97 = scmp.eq.s32.totalorder %s12, 0
      %p98 = por %p96, %p97
      %p99 = scmp.ne.s32.totalorder %s88, %s91
      %p100 = scmp.eq.s32.totalorder %s17, 1
      %p101 = por %p99, %p100
      %p102 = scmp.ne.s32.totalorder %s91, %s92
      %p103 = scmp.eq.s32.totalorder %s17, 0
      %p104 = por %p102, %p103
      %p105 = scmp.ne.s32.totalorder %s91, %s92
      %p106 = scmp.eq.s32.totalorder %s18, 1
      %p107 = por %p105, %p106
      %p109 = scmp.ne.s32.totalorder %s92, %s108
      %p110 = scmp.eq.s32.totalorder %s18, 0
      %p111 = por %p109, %p110
      %s112 = ssub.s32 %s19, %s31
      %s113 = ssub.s32 %s20, %s27
      %s114 = sor.u32 %s112, %s113
      %p115 = scmp.eq.s32.totalorder %s114, 0
      %s117 = sadd.s32 %s116, 1
      %s118 = scalar_select %p115, %s116, %s117
      %p121 = pneg %p115
      %p122 = scmp.eq.s32.totalorder %s12, 1
      %p123 = por %p121, %p122
      %p124 = scmp.ne.s32.totalorder %s116, %s119
      %p125 = scmp.eq.s32.totalorder %s12, 0
      %p126 = por %p124, %p125
      %p127 = scmp.ne.s32.totalorder %s116, %s119
      %p128 = scmp.eq.s32.totalorder %s17, 1
      %p129 = por %p127, %p128
      %p130 = scmp.ne.s32.totalorder %s119, %s120
      %p131 = scmp.eq.s32.totalorder %s17, 0
      %p132 = por %p130, %p131
      %p133 = scmp.ne.s32.totalorder %s119, %s120
      %p134 = scmp.eq.s32.totalorder %s18, 1
      %p135 = por %p133, %p134
      %p137 = scmp.ne.s32.totalorder %s120, %s136
      %p138 = scmp.eq.s32.totalorder %s18, 0
      %p139 = por %p137, %p138
      %p140 = scmp.le.s32.totalorder 1, %s12
      %p141 = scmp.lt.s32.totalorder %s12, 3
      %p142 = pnand %p140, %p141
      %p143 = pneg %p142
      // Predicated region
      $region9: #{run.3} parent=5 // pred_check
        _
      $region10: #{run.3} parent=5 // pred_check_branch
        %145 = sbr.rel (%p142) target = $region12
      $region11: #{run.3} parent=5 // pred_region
        %s146 = ssub.s32 %s12, 1
        // Predicated region
        $region13: #{run.3} parent=11 // pred_check
          %p147 = pneg %p78
        $region14: #{run.3} parent=11 // pred_check_branch
          %149 = sbr.rel (%p147) target = $region16
        $region15: #{run.3} parent=11 // pred_region
          %p150 = scmp.lt.s32.totalorder %s21, 0
          %s151 = scalar_select %p150, %s21, 0
          %s152 = scalar_lea.vmem %s1, %s151
        $region16: #{run.3} parent=11 // pred_fallthru
          _
        // Predicated region
        $region17: #{run.3} parent=11 // pred_check
          %p153 = pneg %p104
        $region18: #{run.3} parent=11 // pred_check_branch
          %155 = sbr.rel (%p153) target = $region20
        $region19: #{run.3} parent=11 // pred_region
          %p156 = scmp.lt.s32.totalorder %s21, 0
          %s157 = scalar_select %p156, %s21, 0
          %s158 = scalar_lea.vmem %s2, %s157
        $region20: #{run.3} parent=11 // pred_fallthru
          _
      $region12: #{run.3} parent=5 // pred_fallthru
        _
      %p159 = scmp.lt.s32.totalorder %s12, 2
      // Predicated region
      $region21: #{run.3} parent=5 // pred_check
        %p160 = pneg %p159
      $region22: #{run.3} parent=5 // pred_check_branch
        %162 = sbr.rel (%p160) target = $region24
      $region23: #{run.3} parent=5 // pred_region
        // Predicated region
        $region25: #{run.3} parent=23 // pred_check
          %p163 = pneg %p46
        $region26: #{run.3} parent=23 // pred_check_branch
          %165 = sbr.rel (%p163) target = $region28
        $region27: #{run.3} parent=23 // pred_region
          %s166 = smul.u32 64, %s20
          %p167 = scmp.lt.s32.totalorder %s19, 0
          %s168 = scalar_select %p167, %s19, 0
          %p169 = scmp.lt.s32.totalorder %s166, 127
          %s170 = scalar_select %p169, %s166, 127
          %s171 = smul.addr %s168, 128
          %s172 = sadd.s32 %s170, %s171
          %s173 = smul.addr %s172, 4
          %s174 = scalar_lea.vmem %s0, %s173
          %s175 = smul.u32 64, %s20
        $region28: #{run.3} parent=23 // pred_fallthru
          _
      $region24: #{run.3} parent=5 // pred_fallthru
        _
      %p176 = scmp.le.s32.totalorder 1, %s12
      %p177 = scmp.lt.s32.totalorder %s12, 3
      %p178 = pnand %p176, %p177
      %p179 = pneg %p178
      // Predicated region
      $region29: #{run.3} parent=5 // pred_check
        _
      $region30: #{run.3} parent=5 // pred_check_branch
        %181 = sbr.rel (%p178) target = $region32
      $region31: #{run.3} parent=5 // pred_region
        %s182 = ssub.s32 %s12, 1
        %s183 = smul.u32 64, %s22
        %p184 = scmp.lt.s32.totalorder %s21, 0
        %s185 = scalar_select %p184, %s21, 0
        %p186 = scmp.lt.s32.totalorder %s183, 127
        %s187 = scalar_select %p186, %s183, 127
        %s188 = smul.addr %s185, 128
        %s189 = sadd.s32 %s187, %s188
        %s190 = smul.addr %s189, 4
        %s191 = scalar_lea.vmem %s0, %s190
        %p192 = pneg %p52
        %p193 = pneg %p49
        %p194 = scmp.lt.s32.totalorder %s21, 0
        %s195 = scalar_select %p194, %s21, 0
        %s196 = scalar_lea.vmem %s1, %s195
        %p197 = pneg %p78
        %p198 = pneg %p75
        %p199 = scmp.lt.s32.totalorder %s21, 0
        %s200 = scalar_select %p199, %s21, 0
        %s201 = scalar_lea.vmem %s2, %s200
        %p202 = pneg %p104
        %p203 = pneg %p101
        %p204 = pneg %p132
        %p205 = pneg %p129
        %s206 = sand.u32 %s119, 1
        %s207 = scalar_lea.sflag [#allocation3], %s206
        %s208 = sand.u32 %s119, 1
        %s209 = smul.addr %s208, 512
        %s210 = scalar_lea.vmem [#allocation2], %s209
        %s211 = smul.u32 64, %s22
        %p212 = scmp.lt.s32.totalorder %s21, 0
        %s213 = scalar_select %p212, %s21, 0
        %p214 = scmp.lt.s32.totalorder %s211, 127
        %s215 = scalar_select %p214, %s211, 127
        %s216 = smul.addr %s213, 128
        %s217 = sadd.s32 %s215, %s216
        %s218 = smul.addr %s217, 4
        %s219 = scalar_lea.vmem %s0, %s218
        %s220 = smul.u32 64, %s22
        %p221 = scmp.lt.s32.totalorder %s21, 0
        %s222 = scalar_select %p221, %s21, 0
        %s223 = scalar_lea.vmem %s1, %s222
        %p224 = scmp.lt.s32.totalorder %s21, 0
        %s225 = scalar_select %p224, %s21, 0
        %s226 = scalar_lea.vmem %s2, %s225
        %s227 = smul.u32 64, %s22
        %v228 = vld [vmem:[%s219] sm:$0xf]
        %v229 = vld [vmem:[%s219 + $0x4] sm:$0xf]
        %v230 = vld [vmem:[%s219 + $0x8] sm:$0xf]
        %v231 = vld [vmem:[%s219 + $0xc] sm:$0xf]
        %v232 = vld [vmem:[%s219 + $0x10] sm:$0xf]
        %v233 = vld [vmem:[%s219 + $0x14] sm:$0xf]
        %v234 = vld [vmem:[%s219 + $0x18] sm:$0xf]
        %v235 = vld [vmem:[%s219 + $0x1c] sm:$0xf]
        %v236 = vld [vmem:[%s219 + $0x20] sm:$0xf]
        %v237 = vld [vmem:[%s219 + $0x24] sm:$0xf]
        %v238 = vld [vmem:[%s219 + $0x28] sm:$0xf]
        %v239 = vld [vmem:[%s219 + $0x2c] sm:$0xf]
        %v240 = vld [vmem:[%s219 + $0x30] sm:$0xf]
        %v241 = vld [vmem:[%s219 + $0x34] sm:$0xf]
        %v242 = vld [vmem:[%s219 + $0x38] sm:$0xf]
        %v243 = vld [vmem:[%s219 + $0x3c] sm:$0xf]
        %v244 = vld [vmem:[%s219 + $0x40] sm:$0xf]
        %v245 = vld [vmem:[%s219 + $0x44] sm:$0xf]
        %v246 = vld [vmem:[%s219 + $0x48] sm:$0xf]
        %v247 = vld [vmem:[%s219 + $0x4c] sm:$0xf]
        %v248 = vld [vmem:[%s219 + $0x50] sm:$0xf]
        %v249 = vld [vmem:[%s219 + $0x54] sm:$0xf]
        %v250 = vld [vmem:[%s219 + $0x58] sm:$0xf]
        %v251 = vld [vmem:[%s219 + $0x5c] sm:$0xf]
        %v252 = vld [vmem:[%s219 + $0x60] sm:$0xf]
        %v253 = vld [vmem:[%s219 + $0x64] sm:$0xf]
        %v254 = vld [vmem:[%s219 + $0x68] sm:$0xf]
        %v255 = vld [vmem:[%s219 + $0x6c] sm:$0xf]
        %v256 = vld [vmem:[%s219 + $0x70] sm:$0xf]
        %v257 = vld [vmem:[%s219 + $0x74] sm:$0xf]
        %v258 = vld [vmem:[%s219 + $0x78] sm:$0xf]
        %v259 = vld [vmem:[%s219 + $0x7c] sm:$0xf]
        %v260 = vld [vmem:[%s219 + $0x80] sm:$0xf]
        %v261 = vld [vmem:[%s219 + $0x84] sm:$0xf]
        %v262 = vld [vmem:[%s219 + $0x88] sm:$0xf]
        %v263 = vld [vmem:[%s219 + $0x8c] sm:$0xf]
        %v264 = vld [vmem:[%s219 + $0x90] sm:$0xf]
        %v265 = vld [vmem:[%s219 + $0x94] sm:$0xf]
        %v266 = vld [vmem:[%s219 + $0x98] sm:$0xf]
        %v267 = vld [vmem:[%s219 + $0x9c] sm:$0xf]
        %v268 = vld [vmem:[%s219 + $0xa0] sm:$0xf]
        %v269 = vld [vmem:[%s219 + $0xa4] sm:$0xf]
        %v270 = vld [vmem:[%s219 + $0xa8] sm:$0xf]
        %v271 = vld [vmem:[%s219 + $0xac] sm:$0xf]
        %v272 = vld [vmem:[%s219 + $0xb0] sm:$0xf]
        %v273 = vld [vmem:[%s219 + $0xb4] sm:$0xf]
        %v274 = vld [vmem:[%s219 + $0xb8] sm:$0xf]
        %v275 = vld [vmem:[%s219 + $0xbc] sm:$0xf]
        %v276 = vld [vmem:[%s219 + $0xc0] sm:$0xf]
        %v277 = vld [vmem:[%s219 + $0xc4] sm:$0xf]
        %v278 = vld [vmem:[%s219 + $0xc8] sm:$0xf]
        %v279 = vld [vmem:[%s219 + $0xcc] sm:$0xf]
        %v280 = vld [vmem:[%s219 + $0xd0] sm:$0xf]
        %v281 = vld [vmem:[%s219 + $0xd4] sm:$0xf]
        %v282 = vld [vmem:[%s219 + $0xd8] sm:$0xf]
        %v283 = vld [vmem:[%s219 + $0xdc] sm:$0xf]
        %v284 = vld [vmem:[%s219 + $0xe0] sm:$0xf]
        %v285 = vld [vmem:[%s219 + $0xe4] sm:$0xf]
        %v286 = vld [vmem:[%s219 + $0xe8] sm:$0xf]
        %v287 = vld [vmem:[%s219 + $0xec] sm:$0xf]
        %v288 = vld [vmem:[%s219 + $0xf0] sm:$0xf]
        %v289 = vld [vmem:[%s219 + $0xf4] sm:$0xf]
        %v290 = vld [vmem:[%s219 + $0xf8] sm:$0xf]
        %v291 = vld [vmem:[%s219 + $0xfc] sm:$0xf]
        %v292 = vunpack.c.l.bf16 %v228
        %v293 = vunpack.c.l.bf16 %v229
        %v294 = vunpack.c.l.bf16 %v230
        %v295 = vunpack.c.l.bf16 %v231
        %v296 = vunpack.c.l.bf16 %v232
        %v297 = vunpack.c.l.bf16 %v233
        %v298 = vunpack.c.l.bf16 %v234
        %v299 = vunpack.c.l.bf16 %v235
        %v300 = vunpack.c.l.bf16 %v236
        %v301 = vunpack.c.l.bf16 %v237
        %v302 = vunpack.c.l.bf16 %v238
        %v303 = vunpack.c.l.bf16 %v239
        %v304 = vunpack.c.l.bf16 %v240
        %v305 = vunpack.c.l.bf16 %v241
        %v306 = vunpack.c.l.bf16 %v242
        %v307 = vunpack.c.l.bf16 %v243
        %v308 = vunpack.c.l.bf16 %v244
        %v309 = vunpack.c.l.bf16 %v245
        %v310 = vunpack.c.l.bf16 %v246
        %v311 = vunpack.c.l.bf16 %v247
        %v312 = vunpack.c.l.bf16 %v248
        %v313 = vunpack.c.l.bf16 %v249
        %v314 = vunpack.c.l.bf16 %v250
        %v315 = vunpack.c.l.bf16 %v251
        %v316 = vunpack.c.l.bf16 %v252
        %v317 = vunpack.c.l.bf16 %v253
        %v318 = vunpack.c.l.bf16 %v254
        %v319 = vunpack.c.l.bf16 %v255
        %v320 = vunpack.c.l.bf16 %v256
        %v321 = vunpack.c.l.bf16 %v257
        %v322 = vunpack.c.l.bf16 %v258
        %v323 = vunpack.c.l.bf16 %v259
        %v324 = vunpack.c.l.bf16 %v260
        %v325 = vunpack.c.l.bf16 %v261
        %v326 = vunpack.c.l.bf16 %v262
        %v327 = vunpack.c.l.bf16 %v263
        %v328 = vunpack.c.l.bf16 %v264
        %v329 = vunpack.c.l.bf16 %v265
        %v330 = vunpack.c.l.bf16 %v266
        %v331 = vunpack.c.l.bf16 %v267
        %v332 = vunpack.c.l.bf16 %v268
        %v333 = vunpack.c.l.bf16 %v269
        %v334 = vunpack.c.l.bf16 %v270
        %v335 = vunpack.c.l.bf16 %v271
        %v336 = vunpack.c.l.bf16 %v272
        %v337 = vunpack.c.l.bf16 %v273
        %v338 = vunpack.c.l.bf16 %v274
        %v339 = vunpack.c.l.bf16 %v275
        %v340 = vunpack.c.l.bf16 %v276
        %v341 = vunpack.c.l.bf16 %v277
        %v342 = vunpack.c.l.bf16 %v278
        %v343 = vunpack.c.l.bf16 %v279
        %v344 = vunpack.c.l.bf16 %v280
        %v345 = vunpack.c.l.bf16 %v281
        %v346 = vunpack.c.l.bf16 %v282
        %v347 = vunpack.c.l.bf16 %v283
        %v348 = vunpack.c.l.bf16 %v284
        %v349 = vunpack.c.l.bf16 %v285
        %v350 = vunpack.c.l.bf16 %v286
        %v351 = vunpack.c.l.bf16 %v287
        %v352 = vunpack.c.l.bf16 %v288
        %v353 = vunpack.c.l.bf16 %v289
        %v354 = vunpack.c.l.bf16 %v290
        %v355 = vunpack.c.l.bf16 %v291
        %v356 = vld [vmem:[%s223] sm:$0x1]
        %v358 = vlaneseq
        %v359 = vshrl.u32 %v358, 7
        %v360 = vsub.s32 0, %v359
        %v361 = vrot.slane %v356, %v360
        %v363 = vsub.f32 %v292, %v361
        %v364 = vsub.f32 %v293, %v361
        %v365 = vsub.f32 %v294, %v361
        %v366 = vsub.f32 %v295, %v361
        %v367 = vsub.f32 %v296, %v361
        %v368 = vsub.f32 %v297, %v361
        %v369 = vsub.f32 %v298, %v361
        %v370 = vsub.f32 %v299, %v361
        %v371 = vsub.f32 %v300, %v361
        %v372 = vsub.f32 %v301, %v361
        %v373 = vsub.f32 %v302, %v361
        %v374 = vsub.f32 %v303, %v361
        %v375 = vsub.f32 %v304, %v361
        %v376 = vsub.f32 %v305, %v361
        %v377 = vsub.f32 %v306, %v361
        %v378 = vsub.f32 %v307, %v361
        %v379 = vsub.f32 %v308, %v361
        %v380 = vsub.f32 %v309, %v361
        %v381 = vsub.f32 %v310, %v361
        %v382 = vsub.f32 %v311, %v361
        %v383 = vsub.f32 %v312, %v361
        %v384 = vsub.f32 %v313, %v361
        %v385 = vsub.f32 %v314, %v361
        %v386 = vsub.f32 %v315, %v361
        %v387 = vsub.f32 %v316, %v361
        %v388 = vsub.f32 %v317, %v361
        %v389 = vsub.f32 %v318, %v361
        %v390 = vsub.f32 %v319, %v361
        %v391 = vsub.f32 %v320, %v361
        %v392 = vsub.f32 %v321, %v361
        %v393 = vsub.f32 %v322, %v361
        %v394 = vsub.f32 %v323, %v361
        %v395 = vsub.f32 %v324, %v361
        %v396 = vsub.f32 %v325, %v361
        %v397 = vsub.f32 %v326, %v361
        %v398 = vsub.f32 %v327, %v361
        %v399 = vsub.f32 %v328, %v361
        %v400 = vsub.f32 %v329, %v361
        %v401 = vsub.f32 %v330, %v361
        %v402 = vsub.f32 %v331, %v361
        %v403 = vsub.f32 %v332, %v361
        %v404 = vsub.f32 %v333, %v361
        %v405 = vsub.f32 %v334, %v361
        %v406 = vsub.f32 %v335, %v361
        %v407 = vsub.f32 %v336, %v361
        %v408 = vsub.f32 %v337, %v361
        %v409 = vsub.f32 %v338, %v361
        %v410 = vsub.f32 %v339, %v361
        %v411 = vsub.f32 %v340, %v361
        %v412 = vsub.f32 %v341, %v361
        %v413 = vsub.f32 %v342, %v361
        %v414 = vsub.f32 %v343, %v361
        %v415 = vsub.f32 %v344, %v361
        %v416 = vsub.f32 %v345, %v361
        %v417 = vsub.f32 %v346, %v361
        %v418 = vsub.f32 %v347, %v361
        %v419 = vsub.f32 %v348, %v361
        %v420 = vsub.f32 %v349, %v361
        %v421 = vsub.f32 %v350, %v361
        %v422 = vsub.f32 %v351, %v361
        %v423 = vsub.f32 %v352, %v361
        %v424 = vsub.f32 %v353, %v361
        %v425 = vsub.f32 %v354, %v361
        %v426 = vsub.f32 %v355, %v361
        %v427 = vld [vmem:[%s226] sm:$0x1]
        %v429 = vlaneseq
        %v430 = vshrl.u32 %v429, 7
        %v431 = vsub.s32 0, %v430
        %v432 = vrot.slane %v427, %v431
        %v434 = vmul.f32 %v363, %v432
        %v435 = vmul.f32 %v364, %v432
        %v436 = vmul.f32 %v365, %v432
        %v437 = vmul.f32 %v366, %v432
        %v438 = vmul.f32 %v367, %v432
        %v439 = vmul.f32 %v368, %v432
        %v440 = vmul.f32 %v369, %v432
        %v441 = vmul.f32 %v370, %v432
        %v442 = vmul.f32 %v371, %v432
        %v443 = vmul.f32 %v372, %v432
        %v444 = vmul.f32 %v373, %v432
        %v445 = vmul.f32 %v374, %v432
        %v446 = vmul.f32 %v375, %v432
        %v447 = vmul.f32 %v376, %v432
        %v448 = vmul.f32 %v377, %v432
        %v449 = vmul.f32 %v378, %v432
        %v450 = vmul.f32 %v379, %v432
        %v451 = vmul.f32 %v380, %v432
        %v452 = vmul.f32 %v381, %v432
        %v453 = vmul.f32 %v382, %v432
        %v454 = vmul.f32 %v383, %v432
        %v455 = vmul.f32 %v384, %v432
        %v456 = vmul.f32 %v385, %v432
        %v457 = vmul.f32 %v386, %v432
        %v458 = vmul.f32 %v387, %v432
        %v459 = vmul.f32 %v388, %v432
        %v460 = vmul.f32 %v389, %v432
        %v461 = vmul.f32 %v390, %v432
        %v462 = vmul.f32 %v391, %v432
        %v463 = vmul.f32 %v392, %v432
        %v464 = vmul.f32 %v393, %v432
        %v465 = vmul.f32 %v394, %v432
        %v466 = vmul.f32 %v395, %v432
        %v467 = vmul.f32 %v396, %v432
        %v468 = vmul.f32 %v397, %v432
        %v469 = vmul.f32 %v398, %v432
        %v470 = vmul.f32 %v399, %v432
        %v471 = vmul.f32 %v400, %v432
        %v472 = vmul.f32 %v401, %v432
        %v473 = vmul.f32 %v402, %v432
        %v474 = vmul.f32 %v403, %v432
        %v475 = vmul.f32 %v404, %v432
        %v476 = vmul.f32 %v405, %v432
        %v477 = vmul.f32 %v406, %v432
        %v478 = vmul.f32 %v407, %v432
        %v479 = vmul.f32 %v408, %v432
        %v480 = vmul.f32 %v409, %v432
        %v481 = vmul.f32 %v410, %v432
        %v482 = vmul.f32 %v411, %v432
        %v483 = vmul.f32 %v412, %v432
        %v484 = vmul.f32 %v413, %v432
        %v485 = vmul.f32 %v414, %v432
        %v486 = vmul.f32 %v415, %v432
        %v487 = vmul.f32 %v416, %v432
        %v488 = vmul.f32 %v417, %v432
        %v489 = vmul.f32 %v418, %v432
        %v490 = vmul.f32 %v419, %v432
        %v491 = vmul.f32 %v420, %v432
        %v492 = vmul.f32 %v421, %v432
        %v493 = vmul.f32 %v422, %v432
        %v494 = vmul.f32 %v423, %v432
        %v495 = vmul.f32 %v424, %v432
        %v496 = vmul.f32 %v425, %v432
        %v497 = vmul.f32 %v426, %v432
        %v498 = vmax.f32 %v434, 0.0
        %v499 = vmax.f32 %v435, 0.0
        %v500 = vmax.f32 %v436, 0.0
        %v501 = vmax.f32 %v437, 0.0
        %v502 = vmax.f32 %v438, 0.0
        %v503 = vmax.f32 %v439, 0.0
        %v504 = vmax.f32 %v440, 0.0
        %v505 = vmax.f32 %v441, 0.0
        %v506 = vmax.f32 %v442, 0.0
        %v507 = vmax.f32 %v443, 0.0
        %v508 = vmax.f32 %v444, 0.0
        %v509 = vmax.f32 %v445, 0.0
        %v510 = vmax.f32 %v446, 0.0
        %v511 = vmax.f32 %v447, 0.0
        %v512 = vmax.f32 %v448, 0.0
        %v513 = vmax.f32 %v449, 0.0
        %v514 = vmax.f32 %v450, 0.0
        %v515 = vmax.f32 %v451, 0.0
        %v516 = vmax.f32 %v452, 0.0
        %v517 = vmax.f32 %v453, 0.0
        %v518 = vmax.f32 %v454, 0.0
        %v519 = vmax.f32 %v455, 0.0
        %v520 = vmax.f32 %v456, 0.0
        %v521 = vmax.f32 %v457, 0.0
        %v522 = vmax.f32 %v458, 0.0
        %v523 = vmax.f32 %v459, 0.0
        %v524 = vmax.f32 %v460, 0.0
        %v525 = vmax.f32 %v461, 0.0
        %v526 = vmax.f32 %v462, 0.0
        %v527 = vmax.f32 %v463, 0.0
        %v528 = vmax.f32 %v464, 0.0
        %v529 = vmax.f32 %v465, 0.0
        %v530 = vmax.f32 %v466, 0.0
        %v531 = vmax.f32 %v467, 0.0
        %v532 = vmax.f32 %v468, 0.0
        %v533 = vmax.f32 %v469, 0.0
        %v534 = vmax.f32 %v470, 0.0
        %v535 = vmax.f32 %v471, 0.0
        %v536 = vmax.f32 %v472, 0.0
        %v537 = vmax.f32 %v473, 0.0
        %v538 = vmax.f32 %v474, 0.0
        %v539 = vmax.f32 %v475, 0.0
        %v540 = vmax.f32 %v476, 0.0
        %v541 = vmax.f32 %v477, 0.0
        %v542 = vmax.f32 %v478, 0.0
        %v543 = vmax.f32 %v479, 0.0
        %v544 = vmax.f32 %v480, 0.0
        %v545 = vmax.f32 %v481, 0.0
        %v546 = vmax.f32 %v482, 0.0
        %v547 = vmax.f32 %v483, 0.0
        %v548 = vmax.f32 %v484, 0.0
        %v549 = vmax.f32 %v485, 0.0
        %v550 = vmax.f32 %v486, 0.0
        %v551 = vmax.f32 %v487, 0.0
        %v552 = vmax.f32 %v488, 0.0
        %v553 = vmax.f32 %v489, 0.0
        %v554 = vmax.f32 %v490, 0.0
        %v555 = vmax.f32 %v491, 0.0
        %v556 = vmax.f32 %v492, 0.0
        %v557 = vmax.f32 %v493, 0.0
        %v558 = vmax.f32 %v494, 0.0
        %v559 = vmax.f32 %v495, 0.0
        %v560 = vmax.f32 %v496, 0.0
        %v561 = vmax.f32 %v497, 0.0
        %vm562 = vcmask 523264
        %563 = vst.msk [vmem:[%s210] sm:$0xff] %vm562, %v498
        %564 = vst.msk [vmem:[%s210 + $0x8] sm:$0xff] %vm562, %v499
        %565 = vst.msk [vmem:[%s210 + $0x10] sm:$0xff] %vm562, %v500
        %566 = vst.msk [vmem:[%s210 + $0x18] sm:$0xff] %vm562, %v501
        %567 = vst.msk [vmem:[%s210 + $0x20] sm:$0xff] %vm562, %v502
        %568 = vst.msk [vmem:[%s210 + $0x28] sm:$0xff] %vm562, %v503
        %569 = vst.msk [vmem:[%s210 + $0x30] sm:$0xff] %vm562, %v504
        %570 = vst.msk [vmem:[%s210 + $0x38] sm:$0xff] %vm562, %v505
        %571 = vst.msk [vmem:[%s210 + $0x40] sm:$0xff] %vm562, %v506
        %572 = vst.msk [vmem:[%s210 + $0x48] sm:$0xff] %vm562, %v507
        %573 = vst.msk [vmem:[%s210 + $0x50] sm:$0xff] %vm562, %v508
        %574 = vst.msk [vmem:[%s210 + $0x58] sm:$0xff] %vm562, %v509
        %575 = vst.msk [vmem:[%s210 + $0x60] sm:$0xff] %vm562, %v510
        %576 = vst.msk [vmem:[%s210 + $0x68] sm:$0xff] %vm562, %v511
        %577 = vst.msk [vmem:[%s210 + $0x70] sm:$0xff] %vm562, %v512
        %578 = vst.msk [vmem:[%s210 + $0x78] sm:$0xff] %vm562, %v513
        %579 = vst.msk [vmem:[%s210 + $0x80] sm:$0xff] %vm562, %v514
        %580 = vst.msk [vmem:[%s210 + $0x88] sm:$0xff] %vm562, %v515
        %581 = vst.msk [vmem:[%s210 + $0x90] sm:$0xff] %vm562, %v516
        %582 = vst.msk [vmem:[%s210 + $0x98] sm:$0xff] %vm562, %v517
        %583 = vst.msk [vmem:[%s210 + $0xa0] sm:$0xff] %vm562, %v518
        %584 = vst.msk [vmem:[%s210 + $0xa8] sm:$0xff] %vm562, %v519
        %585 = vst.msk [vmem:[%s210 + $0xb0] sm:$0xff] %vm562, %v520
        %586 = vst.msk [vmem:[%s210 + $0xb8] sm:$0xff] %vm562, %v521
        %587 = vst.msk [vmem:[%s210 + $0xc0] sm:$0xff] %vm562, %v522
        %588 = vst.msk [vmem:[%s210 + $0xc8] sm:$0xff] %vm562, %v523
        %589 = vst.msk [vmem:[%s210 + $0xd0] sm:$0xff] %vm562, %v524
        %590 = vst.msk [vmem:[%s210 + $0xd8] sm:$0xff] %vm562, %v525
        %591 = vst.msk [vmem:[%s210 + $0xe0] sm:$0xff] %vm562, %v526
        %592 = vst.msk [vmem:[%s210 + $0xe8] sm:$0xff] %vm562, %v527
        %593 = vst.msk [vmem:[%s210 + $0xf0] sm:$0xff] %vm562, %v528
        %594 = vst.msk [vmem:[%s210 + $0xf8] sm:$0xff] %vm562, %v529
        %595 = vst.msk [vmem:[%s210 + $0x100] sm:$0xff] %vm562, %v530
        %596 = vst.msk [vmem:[%s210 + $0x108] sm:$0xff] %vm562, %v531
        %597 = vst.msk [vmem:[%s210 + $0x110] sm:$0xff] %vm562, %v532
        %598 = vst.msk [vmem:[%s210 + $0x118] sm:$0xff] %vm562, %v533
        %599 = vst.msk [vmem:[%s210 + $0x120] sm:$0xff] %vm562, %v534
        %600 = vst.msk [vmem:[%s210 + $0x128] sm:$0xff] %vm562, %v535
        %601 = vst.msk [vmem:[%s210 + $0x130] sm:$0xff] %vm562, %v536
        %602 = vst.msk [vmem:[%s210 + $0x138] sm:$0xff] %vm562, %v537
        %603 = vst.msk [vmem:[%s210 + $0x140] sm:$0xff] %vm562, %v538
        %604 = vst.msk [vmem:[%s210 + $0x148] sm:$0xff] %vm562, %v539
        %605 = vst.msk [vmem:[%s210 + $0x150] sm:$0xff] %vm562, %v540
        %606 = vst.msk [vmem:[%s210 + $0x158] sm:$0xff] %vm562, %v541
        %607 = vst.msk [vmem:[%s210 + $0x160] sm:$0xff] %vm562, %v542
        %608 = vst.msk [vmem:[%s210 + $0x168] sm:$0xff] %vm562, %v543
        %609 = vst.msk [vmem:[%s210 + $0x170] sm:$0xff] %vm562, %v544
        %610 = vst.msk [vmem:[%s210 + $0x178] sm:$0xff] %vm562, %v545
        %611 = vst.msk [vmem:[%s210 + $0x180] sm:$0xff] %vm562, %v546
        %612 = vst.msk [vmem:[%s210 + $0x188] sm:$0xff] %vm562, %v547
        %613 = vst.msk [vmem:[%s210 + $0x190] sm:$0xff] %vm562, %v548
        %614 = vst.msk [vmem:[%s210 + $0x198] sm:$0xff] %vm562, %v549
        %615 = vst.msk [vmem:[%s210 + $0x1a0] sm:$0xff] %vm562, %v550
        %616 = vst.msk [vmem:[%s210 + $0x1a8] sm:$0xff] %vm562, %v551
        %617 = vst.msk [vmem:[%s210 + $0x1b0] sm:$0xff] %vm562, %v552
        %618 = vst.msk [vmem:[%s210 + $0x1b8] sm:$0xff] %vm562, %v553
        %619 = vst.msk [vmem:[%s210 + $0x1c0] sm:$0xff] %vm562, %v554
        %620 = vst.msk [vmem:[%s210 + $0x1c8] sm:$0xff] %vm562, %v555
        %621 = vst.msk [vmem:[%s210 + $0x1d0] sm:$0xff] %vm562, %v556
        %622 = vst.msk [vmem:[%s210 + $0x1d8] sm:$0xff] %vm562, %v557
        %623 = vst.msk [vmem:[%s210 + $0x1e0] sm:$0xff] %vm562, %v558
        %624 = vst.msk [vmem:[%s210 + $0x1e8] sm:$0xff] %vm562, %v559
        %625 = vst.msk [vmem:[%s210 + $0x1f0] sm:$0xff] %vm562, %v560
        %626 = vst.msk [vmem:[%s210 + $0x1f8] sm:$0xff] %vm562, %v561
        %s627 = sand.u32 %s119, 1
        %s628 = scalar_lea.sflag [#allocation3], %s627
        %s629 = sand.u32 %s119, 1
        %s630 = smul.addr %s629, 512
        %s631 = scalar_lea.vmem [#allocation2], %s630
        // Predicated region
        $region33: #{run.3} parent=31 // pred_check
          %p632 = pneg %p129
        $region34: #{run.3} parent=31 // pred_check_branch
          %634 = sbr.rel (%p632) target = $region36
        $region35: #{run.3} parent=31 // pred_region
          %s635 = smul.u32 64, %s22
          %s637 = ssub.s32 8192, 8192
          %638 = vsyncadd %s628, %s637
          %s639 = smul.addr %s21, 128
          %s640 = sadd.s32 %s635, %s639
          %s641 = smul.addr %s640, 128
          %s642 = scalar_lea.hbm %s3, %s641
          %s643 = sshll.u32 %s631, 4
          %s644 = int_to_ptr.vmem [resolvable:$true] %s643
          %649 = dma.vmem_to_hbm [thread:$0]  %s644, 8192, %s642, %s628, 128, 128, 8
        $region36: #{run.3} parent=31 // pred_fallthru
          _
      $region32: #{run.3} parent=5 // pred_fallthru
        _
      %p650 = scmp.le.s32.totalorder 2, %s12
      // Predicated region
      $region37: #{run.3} parent=5 // pred_check
        %p651 = pneg %p650
      $region38: #{run.3} parent=5 // pred_check_branch
        %653 = sbr.rel (%p651) target = $region40
      $region39: #{run.3} parent=5 // pred_region
        %s654 = ssub.s32 %s12, 2
        // Predicated region
        $region41: #{run.3} parent=39 // pred_check
          %p655 = pneg %p135
        $region42: #{run.3} parent=39 // pred_check_branch
          %657 = sbr.rel (%p655) target = $region44
        $region43: #{run.3} parent=39 // pred_region
          %s658 = sand.u32 %s120, 1
          %s659 = scalar_lea.sflag [#allocation3], %s658
          %s660 = sand.u32 %s120, 1
          %s661 = smul.addr %s660, 512
          %s662 = scalar_lea.vmem [#allocation2], %s661
          %663 = dma.done %s659, 8192
        $region44: #{run.3} parent=39 // pred_fallthru
          _
      $region40: #{run.3} parent=5 // pred_fallthru
        _
    $region6: #{run.3} parent=1 // loop_footer
      %s16 = sadd.s32 1, %s12
    $region7: #{run.3} parent=1 // loop_footer_branch
      %11 = sbr.rel target = $region3
    $region8: #{run.3} parent=1 // loop_exit
      _
    %664 = vsyncpa [#allocation3], 1
    %s665 = scalar_lea.sflag [#allocation3], 1
    %666 = vsyncpa %s665, 1

// kernel: run.2
$region0: #{run.2}
  #allocation0 [shape = 'u32[]', space=smem, size = 0x4, offset = 0x4, fixed_abs, tag = 'smem constant byte address 0x4 - core index']
  #allocation1 [shape = 'u32[144,128]{1,0:T(1,128)}', space=vmem, size = 0x12000, scoped, tag = 'internal scratch']
  %s0 = inlined_call_operand.vmem [shape: bf16[1,1024,147], index: 0, kind: input, shape index: {}]
  %s1 = inlined_call_operand.vmem [shape: bf16[147,64], index: 1, kind: input, shape index: {}]
  %s2 = inlined_call_operand.vmem [shape: bf16[1,1024,64], index: 2, kind: output, shape index: {0}]
  %s3 = inlined_call_operand.vmem [shape: f32[1,1,64], index: 3, kind: output, shape index: {1}]
  %s4 = inlined_call_operand.vmem [shape: f32[1,1,64], index: 4, kind: output, shape index: {2}]
  %5 = xla_tuple %s2, %s3, %s4
  %s6 = sld [smem:[#allocation0]]
  $region61: #{run.2} parent=0
    _
  %s8 = ssub.s32 1, %s6
  %s9 = scalar_select 0, %s8, %s6
  loop: start=0, step=1, limit=4
  $region2: #{run.2} parent=0 // loop_pre_header
    _
  $region3: #{run.2} parent=0 // loop_header
    %s11 = sphi 0, %s15
    %p12 = scmp.ge.s32.totalorder %s11, 4
    %s18 = sphi 0, %s30
    %s19 = sphi 0, %s26
    %s20 = sphi 0, %s18
    %s21 = sphi 0, %s19
    %s22 = sphi 0, %s20
    %s23 = sphi 0, %s21
    %s35 = sphi 0, %s37
    %s38 = sphi 0, %s35
    %s39 = sphi 0, %s38
    %s55 = sphi 0, %s39
    %s59 = sphi 0, %s59
    %s61 = sphi 0, %s59
    %s62 = sphi 0, %s61
    %s76 = sphi 0, %s62
    %s84 = sphi 0, %s86
    %s87 = sphi 0, %s84
    %s88 = sphi 0, %s87
    %s104 = sphi 0, %s88
    %s110 = sphi 0, %s112
    %s113 = sphi 0, %s110
    %s114 = sphi 0, %s113
    %s130 = sphi 0, %s114
    %s136 = sphi 0, %s138
    %s139 = sphi 0, %s136
    %s140 = sphi 0, %s139
    %s156 = sphi 0, %s140
  $region4: #{run.2} parent=0 // loop_header_branch
    %14 = sbr.rel (%p12) target = $region8
  $region5: #{run.2} parent=0 // loop_body
    %s16 = ssub.s32 %s11, 1
    %s17 = ssub.s32 %s11, 2
    %s24 = sadd.s32 1, %s19
    %p25 = scmp.ge.s32.totalorder %s24, 2
    %s26 = scalar_select %p25, 0, %s24
    %s27 = sadd.s32 1, %s18
    %s28 = scalar_select %p25, %s27, %s18
    %p29 = scmp.ge.s32.totalorder %s28, 1
    %s30 = scalar_select %p29, 0, %s28
    %s31 = ssub.s32 %s18, %s30
    %s32 = ssub.s32 %s19, %s26
    %s33 = sor.u32 %s31, %s32
    %p34 = scmp.eq.s32.totalorder %s33, 0
    %s36 = sadd.s32 %s35, 1
    %s37 = scalar_select %p34, %s35, %s36
    %p40 = pneg %p34
    %p41 = scmp.eq.s32.totalorder %s11, 1
    %p42 = por %p40, %p41
    %p43 = scmp.ne.s32.totalorder %s35, %s38
    %p44 = scmp.eq.s32.totalorder %s11, 0
    %p45 = por %p43, %p44
    %p46 = scmp.ne.s32.totalorder %s35, %s38
    %p47 = scmp.eq.s32.totalorder %s16, 1
    %p48 = por %p46, %p47
    %p49 = scmp.ne.s32.totalorder %s38, %s39
    %p50 = scmp.eq.s32.totalorder %s16, 0
    %p51 = por %p49, %p50
    %p52 = scmp.ne.s32.totalorder %s38, %s39
    %p53 = scmp.eq.s32.totalorder %s17, 1
    %p54 = por %p52, %p53
    %p56 = scmp.ne.s32.totalorder %s39, %s55
    %p57 = scmp.eq.s32.totalorder %s17, 0
    %p58 = por %p56, %p57
    %s60 = sadd.s32 %s59, 1
    %p63 = scmp.eq.s32.totalorder %s11, 1
    %p64 = scmp.ne.s32.totalorder %s59, %s61
    %p65 = scmp.eq.s32.totalorder %s11, 0
    %p66 = por %p64, %p65
    %p67 = scmp.ne.s32.totalorder %s59, %s61
    %p68 = scmp.eq.s32.totalorder %s16, 1
    %p69 = por %p67, %p68
    %p70 = scmp.ne.s32.totalorder %s61, %s62
    %p71 = scmp.eq.s32.totalorder %s16, 0
    %p72 = por %p70, %p71
    %p73 = scmp.ne.s32.totalorder %s61, %s62
    %p74 = scmp.eq.s32.totalorder %s17, 1
    %p75 = por %p73, %p74
    %p77 = scmp.ne.s32.totalorder %s62, %s76
    %p78 = scmp.eq.s32.totalorder %s17, 0
    %p79 = por %p77, %p78
    %s80 = ssub.s32 %s18, %s30
    %s81 = ssub.s32 %s19, %s26
    %s82 = sor.u32 %s80, %s81
    %p83 = scmp.eq.s32.totalorder %s82, 0
    %s85 = sadd.s32 %s84, 1
    %s86 = scalar_select %p83, %s84, %s85
    %p89 = pneg %p83
    %p90 = scmp.eq.s32.totalorder %s11, 1
    %p91 = por %p89, %p90
    %p92 = scmp.ne.s32.totalorder %s84, %s87
    %p93 = scmp.eq.s32.totalorder %s11, 0
    %p94 = por %p92, %p93
    %p95 = scmp.ne.s32.totalorder %s84, %s87
    %p96 = scmp.eq.s32.totalorder %s16, 1
    %p97 = por %p95, %p96
    %p98 = scmp.ne.s32.totalorder %s87, %s88
    %p99 = scmp.eq.s32.totalorder %s16, 0
    %p100 = por %p98, %p99
    %p101 = scmp.ne.s32.totalorder %s87, %s88
    %p102 = scmp.eq.s32.totalorder %s17, 1
    %p103 = por %p101, %p102
    %p105 = scmp.ne.s32.totalorder %s88, %s104
    %p106 = scmp.eq.s32.totalorder %s17, 0
    %p107 = por %p105, %p106
    %s108 = ssub.s32 %s18, %s30
    %p109 = scmp.eq.s32.totalorder %s108, 0
    %s111 = sadd.s32 %s110, 1
    %s112 = scalar_select %p109, %s110, %s111
    %p115 = pneg %p109
    %p116 = scmp.eq.s32.totalorder %s11, 1
    %p117 = por %p115, %p116
    %p118 = scmp.ne.s32.totalorder %s110, %s113
    %p119 = scmp.eq.s32.totalorder %s11, 0
    %p120 = por %p118, %p119
    %p121 = scmp.ne.s32.totalorder %s110, %s113
    %p122 = scmp.eq.s32.totalorder %s16, 1
    %p123 = por %p121, %p122
    %p124 = scmp.ne.s32.totalorder %s113, %s114
    %p125 = scmp.eq.s32.totalorder %s16, 0
    %p126 = por %p124, %p125
    %p127 = scmp.ne.s32.totalorder %s113, %s114
    %p128 = scmp.eq.s32.totalorder %s17, 1
    %p129 = por %p127, %p128
    %p131 = scmp.ne.s32.totalorder %s114, %s130
    %p132 = scmp.eq.s32.totalorder %s17, 0
    %p133 = por %p131, %p132
    %s134 = ssub.s32 %s18, %s30
    %p135 = scmp.eq.s32.totalorder %s134, 0
    %s137 = sadd.s32 %s136, 1
    %s138 = scalar_select %p135, %s136, %s137
    %p141 = pneg %p135
    %p142 = scmp.eq.s32.totalorder %s11, 1
    %p143 = por %p141, %p142
    %p144 = scmp.ne.s32.totalorder %s136, %s139
    %p145 = scmp.eq.s32.totalorder %s11, 0
    %p146 = por %p144, %p145
    %p147 = scmp.ne.s32.totalorder %s136, %s139
    %p148 = scmp.eq.s32.totalorder %s16, 1
    %p149 = por %p147, %p148
    %p150 = scmp.ne.s32.totalorder %s139, %s140
    %p151 = scmp.eq.s32.totalorder %s16, 0
    %p152 = por %p150, %p151
    %p153 = scmp.ne.s32.totalorder %s139, %s140
    %p154 = scmp.eq.s32.totalorder %s17, 1
    %p155 = por %p153, %p154
    %p157 = scmp.ne.s32.totalorder %s140, %s156
    %p158 = scmp.eq.s32.totalorder %s17, 0
    %p159 = por %p157, %p158
    %p160 = scmp.le.s32.totalorder 1, %s11
    %p161 = scmp.lt.s32.totalorder %s11, 3
    %p162 = pnand %p160, %p161
    %p163 = pneg %p162
    // Predicated region
    $region9: #{run.2} parent=5 // pred_check
      _
    $region10: #{run.2} parent=5 // pred_check_branch
      %165 = sbr.rel (%p162) target = $region12
    $region11: #{run.2} parent=5 // pred_region
      %s166 = ssub.s32 %s11, 1
      // Predicated region
      $region13: #{run.2} parent=11 // pred_check
        %p167 = pneg %p72
      $region14: #{run.2} parent=11 // pred_check_branch
        %169 = sbr.rel (%p167) target = $region16
      $region15: #{run.2} parent=11 // pred_region
        _
      $region16: #{run.2} parent=11 // pred_fallthru
        _
    $region12: #{run.2} parent=5 // pred_fallthru
      _
    %p170 = scmp.lt.s32.totalorder %s11, 2
    // Predicated region
    $region17: #{run.2} parent=5 // pred_check
      %p171 = pneg %p170
    $region18: #{run.2} parent=5 // pred_check_branch
      %173 = sbr.rel (%p171) target = $region20
    $region19: #{run.2} parent=5 // pred_region
      // Predicated region
      $region21: #{run.2} parent=19 // pred_check
        %p174 = pneg %p45
      $region22: #{run.2} parent=19 // pred_check_branch
        %176 = sbr.rel (%p174) target = $region24
      $region23: #{run.2} parent=19 // pred_region
        %s177 = smul.u32 64, %s19
        %p178 = scmp.lt.s32.totalorder %s18, 0
        %s179 = scalar_select %p178, %s18, 0
        %p180 = scmp.lt.s32.totalorder %s177, 127
        %s181 = scalar_select %p180, %s177, 127
        %s182 = smul.addr %s181, 2
        %s183 = smul.addr %s179, 256
        %s184 = sadd.s32 %s182, %s183
        %s185 = smul.addr %s184, 4
        %s186 = scalar_lea.vmem %s0, %s185
        %s187 = smul.u32 64, %s19
      $region24: #{run.2} parent=19 // pred_fallthru
        _
    $region20: #{run.2} parent=5 // pred_fallthru
      _
    %p188 = scmp.le.s32.totalorder 1, %s11
    %p189 = scmp.lt.s32.totalorder %s11, 3
    %p190 = pnand %p188, %p189
    %p191 = pneg %p190
    // Predicated region
    $region25: #{run.2} parent=5 // pred_check
      _
    $region26: #{run.2} parent=5 // pred_check_branch
      %193 = sbr.rel (%p190) target = $region28
    $region27: #{run.2} parent=5 // pred_region
      %s194 = ssub.s32 %s11, 1
      %s195 = smul.u32 64, %s21
      %p196 = scmp.lt.s32.totalorder %s20, 0
      %s197 = scalar_select %p196, %s20, 0
      %p198 = scmp.lt.s32.totalorder %s195, 127
      %s199 = scalar_select %p198, %s195, 127
      %s200 = smul.addr %s199, 2
      %s201 = smul.addr %s197, 256
      %s202 = sadd.s32 %s200, %s201
      %s203 = smul.addr %s202, 4
      %s204 = scalar_lea.vmem %s0, %s203
      %p205 = pneg %p51
      %p206 = pneg %p48
      %p207 = pneg %p72
      %p208 = pneg %p69
      %p209 = pneg %p100
      %p210 = pneg %p97
      %s211 = smul.u32 64, %s21
      %p212 = scmp.lt.s32.totalorder %s20, 0
      %s213 = scalar_select %p212, %s20, 0
      %p214 = scmp.lt.s32.totalorder %s211, 127
      %s215 = scalar_select %p214, %s211, 127
      %s216 = smul.addr %s213, 128
      %s217 = sadd.s32 %s215, %s216
      %s218 = smul.addr %s217, 4
      %s219 = scalar_lea.vmem %s2, %s218
      %p220 = pneg %p126
      %p221 = pneg %p123
      %p222 = scmp.lt.s32.totalorder %s20, 0
      %s223 = scalar_select %p222, %s20, 0
      %s224 = scalar_lea.vmem %s3, %s223
      %p225 = pneg %p152
      %p226 = pneg %p149
      %p227 = scmp.lt.s32.totalorder %s20, 0
      %s228 = scalar_select %p227, %s20, 0
      %s229 = scalar_lea.vmem %s4, %s228
      %s230 = smul.u32 64, %s21
      %p231 = scmp.lt.s32.totalorder %s20, 0
      %s232 = scalar_select %p231, %s20, 0
      %p233 = scmp.lt.s32.totalorder %s230, 127
      %s234 = scalar_select %p233, %s230, 127
      %s235 = smul.addr %s234, 2
      %s236 = smul.addr %s232, 256
      %s237 = sadd.s32 %s235, %s236
      %s238 = smul.addr %s237, 4
      %s239 = scalar_lea.vmem %s0, %s238
      %s240 = smul.u32 64, %s21
      %s241 = smul.u32 64, %s21
      %p242 = scmp.lt.s32.totalorder %s20, 0
      %s243 = scalar_select %p242, %s20, 0
      %p244 = scmp.lt.s32.totalorder %s241, 127
      %s245 = scalar_select %p244, %s241, 127
      %s246 = smul.addr %s243, 128
      %s247 = sadd.s32 %s245, %s246
      %s248 = smul.addr %s247, 4
      %s249 = scalar_lea.vmem %s2, %s248
      %s250 = smul.u32 64, %s21
      %p251 = scmp.lt.s32.totalorder %s20, 0
      %s252 = scalar_select %p251, %s20, 0
      %s253 = scalar_lea.vmem %s3, %s252
      %p254 = scmp.lt.s32.totalorder %s20, 0
      %s255 = scalar_select %p254, %s20, 0
      %s256 = scalar_lea.vmem %s4, %s255
      %v258 = vld [vmem:[%s239] sm:$0xff]
      %v259 = vld [vmem:[%s239 + $0x8] sm:$0xff]
      %v260 = vld [vmem:[%s239 + $0x10] sm:$0xff]
      %v261 = vld [vmem:[%s239 + $0x18] sm:$0xff]
      %v262 = vld [vmem:[%s239 + $0x20] sm:$0xff]
      %v263 = vld [vmem:[%s239 + $0x28] sm:$0xff]
      %v264 = vld [vmem:[%s239 + $0x30] sm:$0xff]
      %v265 = vld [vmem:[%s239 + $0x38] sm:$0xff]
      %v266 = vld [vmem:[%s239 + $0x40] sm:$0xff]
      %v267 = vld [vmem:[%s239 + $0x48] sm:$0xff]
      %v268 = vld [vmem:[%s239 + $0x50] sm:$0xff]
      %v269 = vld [vmem:[%s239 + $0x58] sm:$0xff]
      %v270 = vld [vmem:[%s239 + $0x60] sm:$0xff]
      %v271 = vld [vmem:[%s239 + $0x68] sm:$0xff]
      %v272 = vld [vmem:[%s239 + $0x70] sm:$0xff]
      %v273 = vld [vmem:[%s239 + $0x78] sm:$0xff]
      %v274 = vld [vmem:[%s239 + $0x80] sm:$0xff]
      %v275 = vld [vmem:[%s239 + $0x88] sm:$0xff]
      %v276 = vld [vmem:[%s239 + $0x90] sm:$0xff]
      %v277 = vld [vmem:[%s239 + $0x98] sm:$0xff]
      %v278 = vld [vmem:[%s239 + $0xa0] sm:$0xff]
      %v279 = vld [vmem:[%s239 + $0xa8] sm:$0xff]
      %v280 = vld [vmem:[%s239 + $0xb0] sm:$0xff]
      %v281 = vld [vmem:[%s239 + $0xb8] sm:$0xff]
      %v282 = vld [vmem:[%s239 + $0xc0] sm:$0xff]
      %v283 = vld [vmem:[%s239 + $0xc8] sm:$0xff]
      %v284 = vld [vmem:[%s239 + $0xd0] sm:$0xff]
      %v285 = vld [vmem:[%s239 + $0xd8] sm:$0xff]
      %v286 = vld [vmem:[%s239 + $0xe0] sm:$0xff]
      %v287 = vld [vmem:[%s239 + $0xe8] sm:$0xff]
      %v288 = vld [vmem:[%s239 + $0xf0] sm:$0xff]
      %v289 = vld [vmem:[%s239 + $0xf8] sm:$0xff]
      %v290 = vld [vmem:[%s239 + $0x100] sm:$0xff]
      %v291 = vld [vmem:[%s239 + $0x108] sm:$0xff]
      %v292 = vld [vmem:[%s239 + $0x110] sm:$0xff]
      %v293 = vld [vmem:[%s239 + $0x118] sm:$0xff]
      %v294 = vld [vmem:[%s239 + $0x120] sm:$0xff]
      %v295 = vld [vmem:[%s239 + $0x128] sm:$0xff]
      %v296 = vld [vmem:[%s239 + $0x130] sm:$0xff]
      %v297 = vld [vmem:[%s239 + $0x138] sm:$0xff]
      %v298 = vld [vmem:[%s239 + $0x140] sm:$0xff]
      %v299 = vld [vmem:[%s239 + $0x148] sm:$0xff]
      %v300 = vld [vmem:[%s239 + $0x150] sm:$0xff]
      %v301 = vld [vmem:[%s239 + $0x158] sm:$0xff]
      %v302 = vld [vmem:[%s239 + $0x160] sm:$0xff]
      %v303 = vld [vmem:[%s239 + $0x168] sm:$0xff]
      %v304 = vld [vmem:[%s239 + $0x170] sm:$0xff]
      %v305 = vld [vmem:[%s239 + $0x178] sm:$0xff]
      %v306 = vld [vmem:[%s239 + $0x180] sm:$0xff]
      %v307 = vld [vmem:[%s239 + $0x188] sm:$0xff]
      %v308 = vld [vmem:[%s239 + $0x190] sm:$0xff]
      %v309 = vld [vmem:[%s239 + $0x198] sm:$0xff]
      %v310 = vld [vmem:[%s239 + $0x1a0] sm:$0xff]
      %v311 = vld [vmem:[%s239 + $0x1a8] sm:$0xff]
      %v312 = vld [vmem:[%s239 + $0x1b0] sm:$0xff]
      %v313 = vld [vmem:[%s239 + $0x1b8] sm:$0xff]
      %v314 = vld [vmem:[%s239 + $0x1c0] sm:$0xff]
      %v315 = vld [vmem:[%s239 + $0x1c8] sm:$0xff]
      %v316 = vld [vmem:[%s239 + $0x1d0] sm:$0xff]
      %v317 = vld [vmem:[%s239 + $0x1d8] sm:$0xff]
      %v318 = vld [vmem:[%s239 + $0x1e0] sm:$0xff]
      %v319 = vld [vmem:[%s239 + $0x1e8] sm:$0xff]
      %v320 = vld [vmem:[%s239 + $0x1f0] sm:$0xff]
      %v321 = vld [vmem:[%s239 + $0x1f8] sm:$0xff]
      %v322 = vld [vmem:[%s1] sm:$0xf]
      %v323 = vld [vmem:[%s1 + $0x4] sm:$0xf]
      %v324 = vld [vmem:[%s1 + $0x8] sm:$0xf]
      %v325 = vld [vmem:[%s1 + $0xc] sm:$0xf]
      %v326 = vld [vmem:[%s1 + $0x10] sm:$0xf]
      %v327 = vld [vmem:[%s1 + $0x14] sm:$0xf]
      %v328 = vld [vmem:[%s1 + $0x18] sm:$0xf]
      %v329 = vld [vmem:[%s1 + $0x1c] sm:$0xf]
      %v330 = vld [vmem:[%s1 + $0x20] sm:$0xf]
      %v331 = vld [vmem:[%s1 + $0x24] sm:$0xf]
      %v332 = vld [vmem:[%s1 + $0x28] sm:$0xf]
      %v333 = vld [vmem:[%s1 + $0x2c] sm:$0xf]
      %v334 = vld [vmem:[%s1 + $0x30] sm:$0xf]
      %v335 = vld [vmem:[%s1 + $0x34] sm:$0xf]
      %v336 = vld [vmem:[%s1 + $0x38] sm:$0xf]
      %v337 = vld [vmem:[%s1 + $0x3c] sm:$0xf]
      %v338 = vld [vmem:[%s1 + $0x40] sm:$0xf]
      %v339 = vld [vmem:[%s1 + $0x44] sm:$0xf]
      %v340 = vld [vmem:[%s1 + $0x48] sm:$0x3]
      %v405 = vunpack.c.l.b16 %v258
      %v406 = vunpack.c.h.b16 %v258
      %v407 = vunpack.c.l.b16 %v259
      %v408 = vunpack.c.h.b16 %v259
      %v409 = vunpack.c.l.b16 %v260
      %v410 = vunpack.c.h.b16 %v260
      %v411 = vunpack.c.l.b16 %v261
      %v412 = vunpack.c.h.b16 %v261
      %v413 = vunpack.c.l.b16 %v262
      %v414 = vunpack.c.h.b16 %v262
      %v415 = vunpack.c.l.b16 %v263
      %v416 = vunpack.c.h.b16 %v263
      %v417 = vunpack.c.l.b16 %v264
      %v418 = vunpack.c.h.b16 %v264
      %v419 = vunpack.c.l.b16 %v265
      %v420 = vunpack.c.h.b16 %v265
      %v421 = vunpack.c.l.b16 %v266
      %v422 = vunpack.c.h.b16 %v266
      %v423 = vunpack.c.l.b16 %v267
      %v424 = vunpack.c.h.b16 %v267
      %v425 = vunpack.c.l.b16 %v268
      %v426 = vunpack.c.h.b16 %v268
      %v427 = vunpack.c.l.b16 %v269
      %v428 = vunpack.c.h.b16 %v269
      %v429 = vunpack.c.l.b16 %v270
      %v430 = vunpack.c.h.b16 %v270
      %v431 = vunpack.c.l.b16 %v271
      %v432 = vunpack.c.h.b16 %v271
      %v433 = vunpack.c.l.b16 %v272
      %v434 = vunpack.c.h.b16 %v272
      %v435 = vunpack.c.l.b16 %v273
      %v436 = vunpack.c.h.b16 %v273
      %v437 = vunpack.c.l.b16 %v274
      %v438 = vunpack.c.h.b16 %v274
      %v439 = vunpack.c.l.b16 %v275
      %v440 = vunpack.c.h.b16 %v275
      %v441 = vunpack.c.l.b16 %v276
      %v442 = vunpack.c.h.b16 %v276
      %v443 = vunpack.c.l.b16 %v277
      %v444 = vunpack.c.h.b16 %v277
      %v445 = vunpack.c.l.b16 %v278
      %v446 = vunpack.c.h.b16 %v278
      %v447 = vunpack.c.l.b16 %v279
      %v448 = vunpack.c.h.b16 %v279
      %v449 = vunpack.c.l.b16 %v280
      %v450 = vunpack.c.h.b16 %v280
      %v451 = vunpack.c.l.b16 %v281
      %v452 = vunpack.c.h.b16 %v281
      %v453 = vunpack.c.l.b16 %v282
      %v454 = vunpack.c.h.b16 %v282
      %v455 = vunpack.c.l.b16 %v283
      %v456 = vunpack.c.h.b16 %v283
      %v457 = vunpack.c.l.b16 %v284
      %v458 = vunpack.c.h.b16 %v284
      %v459 = vunpack.c.l.b16 %v285
      %v460 = vunpack.c.h.b16 %v285
      %v461 = vunpack.c.l.b16 %v286
      %v462 = vunpack.c.h.b16 %v286
      %v463 = vunpack.c.l.b16 %v287
      %v464 = vunpack.c.h.b16 %v287
      %v465 = vunpack.c.l.b16 %v288
      %v466 = vunpack.c.h.b16 %v288
      %v467 = vunpack.c.l.b16 %v289
      %v468 = vunpack.c.h.b16 %v289
      %v469 = vunpack.c.l.b16 %v290
      %v470 = vunpack.c.h.b16 %v290
      %v471 = vunpack.c.l.b16 %v291
      %v472 = vunpack.c.h.b16 %v291
      %v473 = vunpack.c.l.b16 %v292
      %v474 = vunpack.c.h.b16 %v292
      %v475 = vunpack.c.l.b16 %v293
      %v476 = vunpack.c.h.b16 %v293
      %v477 = vunpack.c.l.b16 %v294
      %v478 = vunpack.c.h.b16 %v294
      %v479 = vunpack.c.l.b16 %v295
      %v480 = vunpack.c.h.b16 %v295
      %v481 = vunpack.c.l.b16 %v296
      %v482 = vunpack.c.h.b16 %v296
      %v483 = vunpack.c.l.b16 %v297
      %v484 = vunpack.c.h.b16 %v297
      %v485 = vunpack.c.l.b16 %v298
      %v486 = vunpack.c.h.b16 %v298
      %v487 = vunpack.c.l.b16 %v299
      %v488 = vunpack.c.h.b16 %v299
      %v489 = vunpack.c.l.b16 %v300
      %v490 = vunpack.c.h.b16 %v300
      %v491 = vunpack.c.l.b16 %v301
      %v492 = vunpack.c.h.b16 %v301
      %v493 = vunpack.c.l.b16 %v302
      %v494 = vunpack.c.h.b16 %v302
      %v495 = vunpack.c.l.b16 %v303
      %v496 = vunpack.c.h.b16 %v303
      %v497 = vunpack.c.l.b16 %v304
      %v498 = vunpack.c.h.b16 %v304
      %v499 = vunpack.c.l.b16 %v305
      %v500 = vunpack.c.h.b16 %v305
      %v501 = vunpack.c.l.b16 %v306
      %v502 = vunpack.c.h.b16 %v306
      %v503 = vunpack.c.l.b16 %v307
      %v504 = vunpack.c.h.b16 %v307
      %v505 = vunpack.c.l.b16 %v308
      %v506 = vunpack.c.h.b16 %v308
      %v507 = vunpack.c.l.b16 %v309
      %v508 = vunpack.c.h.b16 %v309
      %v509 = vunpack.c.l.b16 %v310
      %v510 = vunpack.c.h.b16 %v310
      %v511 = vunpack.c.l.b16 %v311
      %v512 = vunpack.c.h.b16 %v311
      %v513 = vunpack.c.l.b16 %v312
      %v514 = vunpack.c.h.b16 %v312
      %v515 = vunpack.c.l.b16 %v313
      %v516 = vunpack.c.h.b16 %v313
      %v517 = vunpack.c.l.b16 %v314
      %v518 = vunpack.c.h.b16 %v314
      %v519 = vunpack.c.l.b16 %v315
      %v520 = vunpack.c.h.b16 %v315
      %v521 = vunpack.c.l.b16 %v316
      %v522 = vunpack.c.h.b16 %v316
      %v523 = vunpack.c.l.b16 %v317
      %v524 = vunpack.c.h.b16 %v317
      %v525 = vunpack.c.l.b16 %v318
      %v526 = vunpack.c.h.b16 %v318
      %v527 = vunpack.c.l.b16 %v319
      %v528 = vunpack.c.h.b16 %v319
      %v529 = vunpack.c.l.b16 %v320
      %v530 = vunpack.c.h.b16 %v320
      %v531 = vunpack.c.l.b16 %v321
      %v532 = vunpack.c.h.b16 %v321
      %v533 = vpack.c.b16 %v407, %v405
      %v534 = vpack.c.b16 %v408, %v406
      %v535 = vpack.c.b16 %v411, %v409
      %v536 = vpack.c.b16 %v412, %v410
      %v537 = vpack.c.b16 %v415, %v413
      %v538 = vpack.c.b16 %v416, %v414
      %v539 = vpack.c.b16 %v419, %v417
      %v540 = vpack.c.b16 %v420, %v418
      %v541 = vpack.c.b16 %v423, %v421
      %v542 = vpack.c.b16 %v424, %v422
      %v543 = vpack.c.b16 %v427, %v425
      %v544 = vpack.c.b16 %v428, %v426
      %v545 = vpack.c.b16 %v431, %v429
      %v546 = vpack.c.b16 %v432, %v430
      %v547 = vpack.c.b16 %v435, %v433
      %v548 = vpack.c.b16 %v436, %v434
      %v549 = vpack.c.b16 %v439, %v437
      %v550 = vpack.c.b16 %v440, %v438
      %v551 = vpack.c.b16 %v443, %v441
      %v552 = vpack.c.b16 %v444, %v442
      %v553 = vpack.c.b16 %v447, %v445
      %v554 = vpack.c.b16 %v448, %v446
      %v555 = vpack.c.b16 %v451, %v449
      %v556 = vpack.c.b16 %v452, %v450
      %v557 = vpack.c.b16 %v455, %v453
      %v558 = vpack.c.b16 %v456, %v454
      %v559 = vpack.c.b16 %v459, %v457
      %v560 = vpack.c.b16 %v460, %v458
      %v561 = vpack.c.b16 %v463, %v461
      %v562 = vpack.c.b16 %v464, %v462
      %v563 = vpack.c.b16 %v467, %v465
      %v564 = vpack.c.b16 %v468, %v466
      %v565 = vpack.c.b16 %v471, %v469
      %v566 = vpack.c.b16 %v472, %v470
      %v567 = vpack.c.b16 %v475, %v473
      %v568 = vpack.c.b16 %v476, %v474
      %v569 = vpack.c.b16 %v479, %v477
      %v570 = vpack.c.b16 %v480, %v478
      %v571 = vpack.c.b16 %v483, %v481
      %v572 = vpack.c.b16 %v484, %v482
      %v573 = vpack.c.b16 %v487, %v485
      %v574 = vpack.c.b16 %v488, %v486
      %v575 = vpack.c.b16 %v491, %v489
      %v576 = vpack.c.b16 %v492, %v490
      %v577 = vpack.c.b16 %v495, %v493
      %v578 = vpack.c.b16 %v496, %v494
      %v579 = vpack.c.b16 %v499, %v497
      %v580 = vpack.c.b16 %v500, %v498
      %v581 = vpack.c.b16 %v503, %v501
      %v582 = vpack.c.b16 %v504, %v502
      %v583 = vpack.c.b16 %v507, %v505
      %v584 = vpack.c.b16 %v508, %v506
      %v585 = vpack.c.b16 %v511, %v509
      %v586 = vpack.c.b16 %v512, %v510
      %v587 = vpack.c.b16 %v515, %v513
      %v588 = vpack.c.b16 %v516, %v514
      %v589 = vpack.c.b16 %v519, %v517
      %v590 = vpack.c.b16 %v520, %v518
      %v591 = vpack.c.b16 %v523, %v521
      %v592 = vpack.c.b16 %v524, %v522
      %v593 = vpack.c.b16 %v527, %v525
      %v594 = vpack.c.b16 %v528, %v526
      %v595 = vpack.c.b16 %v531, %v529
      %v596 = vpack.c.b16 %v532, %v530
      %v648 = vunpack.c.l.b16 %v322
      %v649 = vunpack.c.l.b16 %v323
      %v650 = vunpack.c.l.b16 %v324
      %v651 = vunpack.c.l.b16 %v325
      %v652 = vunpack.c.l.b16 %v326
      %v653 = vunpack.c.l.b16 %v327
      %v654 = vunpack.c.l.b16 %v328
      %v655 = vunpack.c.l.b16 %v329
      %v656 = vunpack.c.l.b16 %v330
      %v657 = vunpack.c.l.b16 %v331
      %v658 = vunpack.c.l.b16 %v332
      %v659 = vunpack.c.l.b16 %v333
      %v660 = vunpack.c.l.b16 %v334
      %v661 = vunpack.c.l.b16 %v335
      %v662 = vunpack.c.l.b16 %v336
      %v663 = vunpack.c.l.b16 %v337
      %v664 = vunpack.c.l.b16 %v338
      %v665 = vunpack.c.l.b16 %v339
      %v666 = vunpack.c.l.b16 %v340
      %v667 = vpack.c.b16 %v649, %v648
      %v668 = vpack.c.b16 %v651, %v650
      %v669 = vpack.c.b16 %v653, %v652
      %v670 = vpack.c.b16 %v655, %v654
      %v671 = vpack.c.b16 %v657, %v656
      %v672 = vpack.c.b16 %v659, %v658
      %v673 = vpack.c.b16 %v661, %v660
      %v674 = vpack.c.b16 %v663, %v662
      %v675 = vpack.c.b16 %v665, %v664
      %v676 = vpack.c.b16 %v666, %v666
      %vm686 = vcmask 154624
      %v688 = vsel %vm686, %v534, 0
      %v691 = vsel %vm686, %v536, 0
      %v694 = vsel %vm686, %v538, 0
      %v697 = vsel %vm686, %v540, 0
      %v700 = vsel %vm686, %v542, 0
      %v703 = vsel %vm686, %v544, 0
      %v706 = vsel %vm686, %v546, 0
      %v709 = vsel %vm686, %v548, 0
      %v712 = vsel %vm686, %v550, 0
      %v715 = vsel %vm686, %v552, 0
      %v718 = vsel %vm686, %v554, 0
      %v721 = vsel %vm686, %v556, 0
      %v724 = vsel %vm686, %v558, 0
      %v727 = vsel %vm686, %v560, 0
      %v730 = vsel %vm686, %v562, 0
      %v733 = vsel %vm686, %v564, 0
      %v736 = vsel %vm686, %v566, 0
      %v739 = vsel %vm686, %v568, 0
      %v742 = vsel %vm686, %v570, 0
      %v745 = vsel %vm686, %v572, 0
      %v748 = vsel %vm686, %v574, 0
      %v751 = vsel %vm686, %v576, 0
      %v754 = vsel %vm686, %v578, 0
      %v757 = vsel %vm686, %v580, 0
      %v760 = vsel %vm686, %v582, 0
      %v763 = vsel %vm686, %v584, 0
      %v766 = vsel %vm686, %v586, 0
      %v769 = vsel %vm686, %v588, 0
      %v772 = vsel %vm686, %v590, 0
      %v775 = vsel %vm686, %v592, 0
      %v778 = vsel %vm686, %v594, 0
      %v781 = vsel %vm686, %v596, 0
      %vm783 = vcmask 1040384
      %vm784 = vcmask 1041408
      %v785 = vsel %vm783, 4294967295, 65535
      %v786 = vsel %vm784, %v785, 0
      %v788 = vand.u32 %v676, %v786
      %790 = vmatprep.subr.bf16.mxu0 0
      %791 = vmatpush1.bf16.msra.mxu0 %v674
      %792 = vmatprep.subr.bf16.mxu0 0
      %793 = vmatpush1.bf16.msra.mxu0 %v673
      %794 = vmatprep.subr.bf16.mxu0 0
      %795 = vmatpush1.bf16.msra.mxu0 %v672
      %796 = vmatprep.subr.bf16.mxu0 0
      %797 = vmatpush1.bf16.msra.mxu0 %v671
      %798 = vmatprep.subr.bf16.mxu0 0
      %799 = vmatpush1.bf16.msra.mxu0 %v670
      %800 = vmatprep.subr.bf16.mxu0 0
      %801 = vmatpush1.bf16.msra.mxu0 %v669
      %802 = vmatprep.subr.bf16.mxu0 0
      %803 = vmatpush1.bf16.msra.mxu0 %v668
      %804 = vmatprep.subr.bf16.mxu0 0
      %805 = vmatpush1.bf16.msra.mxu0 %v667
      %806 = vmatprep.subr.bf16.mxu0 0
      %807 = vmatpush2.bf16.msra.mxu0 0
      %808 = vmatprep.subr.bf16.mxu0 0
      %809 = vmatpush2.bf16.msra.mxu0 0
      %810 = vmatprep.subr.bf16.mxu0 0
      %811 = vmatpush2.bf16.msra.mxu0 0
      %812 = vmatprep.subr.bf16.mxu0 0
      %813 = vmatpush2.bf16.msra.mxu0 0
      %814 = vmatprep.subr.bf16.mxu0 0
      %815 = vmatpush2.bf16.msra.mxu0 0
      %816 = vmatprep.subr.bf16.mxu0 0
      %817 = vmatpush2.bf16.msra.mxu0 0
      %818 = vmatprep.subr.bf16.mxu0 0
      %819 = vmatpush2.bf16.msra.mxu0 %v788
      %820 = vmatprep.subr.bf16.mxu0 0
      %821 = vmatpush2.bf16.msra.mxu0 %v675
      %822 = vmatprep.mubr.bf16.mxu0 %v688
      %823 = vmatmul.mubr.bf16.gmra.mxu0 %v533
      %v824 = vpop.f32.mrf.mxu0
      %v825 = vadd.f32 0.0, %v824
      %v826 = vpop.f32.mrf.mxu0
      %v827 = vpop.f32.mrf.mxu0
      %v828 = vadd.f32 0.0, %v827
      %v829 = vpop.f32.mrf.mxu0
      %830 = vmatprep.mubr.bf16.mxu0 %v691
      %831 = vmatmul.mubr.bf16.gmra.mxu0 %v535
      %v832 = vpop.f32.mrf.mxu0
      %v833 = vadd.f32 0.0, %v832
      %v834 = vpop.f32.mrf.mxu0
      %v835 = vpop.f32.mrf.mxu0
      %v836 = vadd.f32 0.0, %v835
      %v837 = vpop.f32.mrf.mxu0
      %838 = vmatprep.mubr.bf16.mxu0 %v694
      %839 = vmatmul.mubr.bf16.gmra.mxu0 %v537
      %v840 = vpop.f32.mrf.mxu0
      %v841 = vadd.f32 0.0, %v840
      %v842 = vpop.f32.mrf.mxu0
      %v843 = vpop.f32.mrf.mxu0
      %v844 = vadd.f32 0.0, %v843
      %v845 = vpop.f32.mrf.mxu0
      %846 = vmatprep.mubr.bf16.mxu0 %v697
      %847 = vmatmul.mubr.bf16.gmra.mxu0 %v539
      %v848 = vpop.f32.mrf.mxu0
      %v849 = vadd.f32 0.0, %v848
      %v850 = vpop.f32.mrf.mxu0
      %v851 = vpop.f32.mrf.mxu0
      %v852 = vadd.f32 0.0, %v851
      %v853 = vpop.f32.mrf.mxu0
      %854 = vmatprep.mubr.bf16.mxu0 %v700
      %855 = vmatmul.mubr.bf16.gmra.mxu0 %v541
      %v856 = vpop.f32.mrf.mxu0
      %v857 = vadd.f32 0.0, %v856
      %v858 = vpop.f32.mrf.mxu0
      %v859 = vpop.f32.mrf.mxu0
      %v860 = vadd.f32 0.0, %v859
      %v861 = vpop.f32.mrf.mxu0
      %862 = vmatprep.mubr.bf16.mxu0 %v703
      %863 = vmatmul.mubr.bf16.gmra.mxu0 %v543
      %v864 = vpop.f32.mrf.mxu0
      %v865 = vadd.f32 0.0, %v864
      %v866 = vpop.f32.mrf.mxu0
      %v867 = vpop.f32.mrf.mxu0
      %v868 = vadd.f32 0.0, %v867
      %v869 = vpop.f32.mrf.mxu0
      %870 = vmatprep.mubr.bf16.mxu0 %v706
      %871 = vmatmul.mubr.bf16.gmra.mxu0 %v545
      %v872 = vpop.f32.mrf.mxu0
      %v873 = vadd.f32 0.0, %v872
      %v874 = vpop.f32.mrf.mxu0
      %v875 = vpop.f32.mrf.mxu0
      %v876 = vadd.f32 0.0, %v875
      %v877 = vpop.f32.mrf.mxu0
      %878 = vmatprep.mubr.bf16.mxu0 %v709
      %879 = vmatmul.mubr.bf16.gmra.mxu0 %v547
      %v880 = vpop.f32.mrf.mxu0
      %v881 = vadd.f32 0.0, %v880
      %v882 = vpop.f32.mrf.mxu0
      %v883 = vpop.f32.mrf.mxu0
      %v884 = vadd.f32 0.0, %v883
      %v885 = vpop.f32.mrf.mxu0
      %886 = vmatprep.mubr.bf16.mxu0 %v712
      %887 = vmatmul.mubr.bf16.gmra.mxu0 %v549
      %v888 = vpop.f32.mrf.mxu0
      %v889 = vadd.f32 0.0, %v888
      %v890 = vpop.f32.mrf.mxu0
      %v891 = vpop.f32.mrf.mxu0
      %v892 = vadd.f32 0.0, %v891
      %v893 = vpop.f32.mrf.mxu0
      %894 = vmatprep.mubr.bf16.mxu0 %v715
      %895 = vmatmul.mubr.bf16.gmra.mxu0 %v551
      %v896 = vpop.f32.mrf.mxu0
      %v897 = vadd.f32 0.0, %v896
      %v898 = vpop.f32.mrf.mxu0
      %v899 = vpop.f32.mrf.mxu0
      %v900 = vadd.f32 0.0, %v899
      %v901 = vpop.f32.mrf.mxu0
      %902 = vmatprep.mubr.bf16.mxu0 %v718
      %903 = vmatmul.mubr.bf16.gmra.mxu0 %v553
      %v904 = vpop.f32.mrf.mxu0
      %v905 = vadd.f32 0.0, %v904
      %v906 = vpop.f32.mrf.mxu0
      %v907 = vpop.f32.mrf.mxu0
      %v908 = vadd.f32 0.0, %v907
      %v909 = vpop.f32.mrf.mxu0
      %910 = vmatprep.mubr.bf16.mxu0 %v721
      %911 = vmatmul.mubr.bf16.gmra.mxu0 %v555
      %v912 = vpop.f32.mrf.mxu0
      %v913 = vadd.f32 0.0, %v912
      %v914 = vpop.f32.mrf.mxu0
      %v915 = vpop.f32.mrf.mxu0
      %v916 = vadd.f32 0.0, %v915
      %v917 = vpop.f32.mrf.mxu0
      %918 = vmatprep.mubr.bf16.mxu0 %v724
      %919 = vmatmul.mubr.bf16.gmra.mxu0 %v557
      %v920 = vpop.f32.mrf.mxu0
      %v921 = vadd.f32 0.0, %v920
      %v922 = vpop.f32.mrf.mxu0
      %v923 = vpop.f32.mrf.mxu0
      %v924 = vadd.f32 0.0, %v923
      %v925 = vpop.f32.mrf.mxu0
      %926 = vmatprep.mubr.bf16.mxu0 %v727
      %927 = vmatmul.mubr.bf16.gmra.mxu0 %v559
      %v928 = vpop.f32.mrf.mxu0
      %v929 = vadd.f32 0.0, %v928
      %v930 = vpop.f32.mrf.mxu0
      %v931 = vpop.f32.mrf.mxu0
      %v932 = vadd.f32 0.0, %v931
      %v933 = vpop.f32.mrf.mxu0
      %934 = vmatprep.mubr.bf16.mxu0 %v730
      %935 = vmatmul.mubr.bf16.gmra.mxu0 %v561
      %v936 = vpop.f32.mrf.mxu0
      %v937 = vadd.f32 0.0, %v936
      %v938 = vpop.f32.mrf.mxu0
      %v939 = vpop.f32.mrf.mxu0
      %v940 = vadd.f32 0.0, %v939
      %v941 = vpop.f32.mrf.mxu0
      %942 = vmatprep.mubr.bf16.mxu0 %v733
      %943 = vmatmul.mubr.bf16.gmra.mxu0 %v563
      %v944 = vpop.f32.mrf.mxu0
      %v945 = vadd.f32 0.0, %v944
      %v946 = vpop.f32.mrf.mxu0
      %v947 = vpop.f32.mrf.mxu0
      %v948 = vadd.f32 0.0, %v947
      %v949 = vpop.f32.mrf.mxu0
      %950 = vmatprep.mubr.bf16.mxu0 %v736
      %951 = vmatmul.mubr.bf16.gmra.mxu0 %v565
      %v952 = vpop.f32.mrf.mxu0
      %v953 = vadd.f32 0.0, %v952
      %v954 = vpop.f32.mrf.mxu0
      %v955 = vpop.f32.mrf.mxu0
      %v956 = vadd.f32 0.0, %v955
      %v957 = vpop.f32.mrf.mxu0
      %958 = vmatprep.mubr.bf16.mxu0 %v739
      %959 = vmatmul.mubr.bf16.gmra.mxu0 %v567
      %v960 = vpop.f32.mrf.mxu0
      %v961 = vadd.f32 0.0, %v960
      %v962 = vpop.f32.mrf.mxu0
      %v963 = vpop.f32.mrf.mxu0
      %v964 = vadd.f32 0.0, %v963
      %v965 = vpop.f32.mrf.mxu0
      %966 = vmatprep.mubr.bf16.mxu0 %v742
      %967 = vmatmul.mubr.bf16.gmra.mxu0 %v569
      %v968 = vpop.f32.mrf.mxu0
      %v969 = vadd.f32 0.0, %v968
      %v970 = vpop.f32.mrf.mxu0
      %v971 = vpop.f32.mrf.mxu0
      %v972 = vadd.f32 0.0, %v971
      %v973 = vpop.f32.mrf.mxu0
      %974 = vmatprep.mubr.bf16.mxu0 %v745
      %975 = vmatmul.mubr.bf16.gmra.mxu0 %v571
      %v976 = vpop.f32.mrf.mxu0
      %v977 = vadd.f32 0.0, %v976
      %v978 = vpop.f32.mrf.mxu0
      %v979 = vpop.f32.mrf.mxu0
      %v980 = vadd.f32 0.0, %v979
      %v981 = vpop.f32.mrf.mxu0
      %982 = vmatprep.mubr.bf16.mxu0 %v748
      %983 = vmatmul.mubr.bf16.gmra.mxu0 %v573
      %v984 = vpop.f32.mrf.mxu0
      %v985 = vadd.f32 0.0, %v984
      %v986 = vpop.f32.mrf.mxu0
      %v987 = vpop.f32.mrf.mxu0
      %v988 = vadd.f32 0.0, %v987
      %v989 = vpop.f32.mrf.mxu0
      %990 = vmatprep.mubr.bf16.mxu0 %v751
      %991 = vmatmul.mubr.bf16.gmra.mxu0 %v575
      %v992 = vpop.f32.mrf.mxu0
      %v993 = vadd.f32 0.0, %v992
      %v994 = vpop.f32.mrf.mxu0
      %v995 = vpop.f32.mrf.mxu0
      %v996 = vadd.f32 0.0, %v995
      %v997 = vpop.f32.mrf.mxu0
      %998 = vmatprep.mubr.bf16.mxu0 %v754
      %999 = vmatmul.mubr.bf16.gmra.mxu0 %v577
      %v1000 = vpop.f32.mrf.mxu0
      %v1001 = vadd.f32 0.0, %v1000
      %v1002 = vpop.f32.mrf.mxu0
      %v1003 = vpop.f32.mrf.mxu0
      %v1004 = vadd.f32 0.0, %v1003
      %v1005 = vpop.f32.mrf.mxu0
      %1006 = vmatprep.mubr.bf16.mxu0 %v757
      %1007 = vmatmul.mubr.bf16.gmra.mxu0 %v579
      %v1008 = vpop.f32.mrf.mxu0
      %v1009 = vadd.f32 0.0, %v1008
      %v1010 = vpop.f32.mrf.mxu0
      %v1011 = vpop.f32.mrf.mxu0
      %v1012 = vadd.f32 0.0, %v1011
      %v1013 = vpop.f32.mrf.mxu0
      %1014 = vmatprep.mubr.bf16.mxu0 %v760
      %1015 = vmatmul.mubr.bf16.gmra.mxu0 %v581
      %v1016 = vpop.f32.mrf.mxu0
      %v1017 = vadd.f32 0.0, %v1016
      %v1018 = vpop.f32.mrf.mxu0
      %v1019 = vpop.f32.mrf.mxu0
      %v1020 = vadd.f32 0.0, %v1019
      %v1021 = vpop.f32.mrf.mxu0
      %1022 = vmatprep.mubr.bf16.mxu0 %v763
      %1023 = vmatmul.mubr.bf16.gmra.mxu0 %v583
      %v1024 = vpop.f32.mrf.mxu0
      %v1025 = vadd.f32 0.0, %v1024
      %v1026 = vpop.f32.mrf.mxu0
      %v1027 = vpop.f32.mrf.mxu0
      %v1028 = vadd.f32 0.0, %v1027
      %v1029 = vpop.f32.mrf.mxu0
      %1030 = vmatprep.mubr.bf16.mxu0 %v766
      %1031 = vmatmul.mubr.bf16.gmra.mxu0 %v585
      %v1032 = vpop.f32.mrf.mxu0
      %v1033 = vadd.f32 0.0, %v1032
      %v1034 = vpop.f32.mrf.mxu0
      %v1035 = vpop.f32.mrf.mxu0
      %v1036 = vadd.f32 0.0, %v1035
      %v1037 = vpop.f32.mrf.mxu0
      %1038 = vmatprep.mubr.bf16.mxu0 %v769
      %1039 = vmatmul.mubr.bf16.gmra.mxu0 %v587
      %v1040 = vpop.f32.mrf.mxu0
      %v1041 = vadd.f32 0.0, %v1040
      %v1042 = vpop.f32.mrf.mxu0
      %v1043 = vpop.f32.mrf.mxu0
      %v1044 = vadd.f32 0.0, %v1043
      %v1045 = vpop.f32.mrf.mxu0
      %1046 = vmatprep.mubr.bf16.mxu0 %v772
      %1047 = vmatmul.mubr.bf16.gmra.mxu0 %v589
      %v1048 = vpop.f32.mrf.mxu0
      %v1049 = vadd.f32 0.0, %v1048
      %v1050 = vpop.f32.mrf.mxu0
      %v1051 = vpop.f32.mrf.mxu0
      %v1052 = vadd.f32 0.0, %v1051
      %v1053 = vpop.f32.mrf.mxu0
      %1054 = vmatprep.mubr.bf16.mxu0 %v775
      %1055 = vmatmul.mubr.bf16.gmra.mxu0 %v591
      %v1056 = vpop.f32.mrf.mxu0
      %v1057 = vadd.f32 0.0, %v1056
      %v1058 = vpop.f32.mrf.mxu0
      %v1059 = vpop.f32.mrf.mxu0
      %v1060 = vadd.f32 0.0, %v1059
      %v1061 = vpop.f32.mrf.mxu0
      %1062 = vmatprep.mubr.bf16.mxu0 %v778
      %1063 = vmatmul.mubr.bf16.gmra.mxu0 %v593
      %v1064 = vpop.f32.mrf.mxu0
      %v1065 = vadd.f32 0.0, %v1064
      %v1066 = vpop.f32.mrf.mxu0
      %v1067 = vpop.f32.mrf.mxu0
      %v1068 = vadd.f32 0.0, %v1067
      %v1069 = vpop.f32.mrf.mxu0
      %1070 = vmatprep.mubr.bf16.mxu0 %v781
      %1071 = vmatmul.mubr.bf16.gmra.mxu0 %v595
      %v1072 = vpop.f32.mrf.mxu0
      %v1073 = vadd.f32 0.0, %v1072
      %v1074 = vpop.f32.mrf.mxu0
      %v1075 = vpop.f32.mrf.mxu0
      %v1076 = vadd.f32 0.0, %v1075
      %v1077 = vpop.f32.mrf.mxu0
      %1078 = vdwg.mxu0
      %p1079 = scmp.eq.s32.totalorder %s21, 0
      // Predicated region
      $region29: #{run.2} parent=27 // pred_check
        %p1080 = pneg %p1079
      $region30: #{run.2} parent=27 // pred_check_branch
        %1082 = sbr.rel (%p1080) target = $region32
      $region31: #{run.2} parent=27 // pred_region
        %vm1083 = vcmask 516096
        %1084 = vst.msk [vmem:[%s253] sm:$0x1] %vm1083, 0.0
        %1085 = vst.msk [vmem:[%s256] sm:$0x1] %vm1083, 0.0
      $region32: #{run.2} parent=27 // pred_fallthru
        _
      %v1086 = vld [vmem:[%s253] sm:$0x1]
      %vm1087 = vcmask 523264
      %v1088 = vsel %vm1087, %v825, 0.0
      %v1089 = vsel %vm1087, %v828, 0.0
      %v1090 = vadd.f32 %v1088, %v1089
      %v1091 = vsel %vm1087, %v833, 0.0
      %v1092 = vadd.f32 %v1090, %v1091
      %v1093 = vsel %vm1087, %v836, 0.0
      %v1094 = vadd.f32 %v1092, %v1093
      %v1095 = vsel %vm1087, %v841, 0.0
      %v1096 = vadd.f32 %v1094, %v1095
      %v1097 = vsel %vm1087, %v844, 0.0
      %v1098 = vadd.f32 %v1096, %v1097
      %v1099 = vsel %vm1087, %v849, 0.0
      %v1100 = vadd.f32 %v1098, %v1099
      %v1101 = vsel %vm1087, %v852, 0.0
      %v1102 = vadd.f32 %v1100, %v1101
      %v1103 = vsel %vm1087, %v857, 0.0
      %v1104 = vadd.f32 %v1102, %v1103
      %v1105 = vsel %vm1087, %v860, 0.0
      %v1106 = vadd.f32 %v1104, %v1105
      %v1107 = vsel %vm1087, %v865, 0.0
      %v1108 = vadd.f32 %v1106, %v1107
      %v1109 = vsel %vm1087, %v868, 0.0
      %v1110 = vadd.f32 %v1108, %v1109
      %v1111 = vsel %vm1087, %v873, 0.0
      %v1112 = vadd.f32 %v1110, %v1111
      %v1113 = vsel %vm1087, %v876, 0.0
      %v1114 = vadd.f32 %v1112, %v1113
      %v1115 = vsel %vm1087, %v881, 0.0
      %v1116 = vadd.f32 %v1114, %v1115
      %v1117 = vsel %vm1087, %v884, 0.0
      %v1118 = vadd.f32 %v1116, %v1117
      %v1119 = vsel %vm1087, %v889, 0.0
      %v1120 = vadd.f32 %v1118, %v1119
      %v1121 = vsel %vm1087, %v892, 0.0
      %v1122 = vadd.f32 %v1120, %v1121
      %v1123 = vsel %vm1087, %v897, 0.0
      %v1124 = vadd.f32 %v1122, %v1123
      %v1125 = vsel %vm1087, %v900, 0.0
      %v1126 = vadd.f32 %v1124, %v1125
      %v1127 = vsel %vm1087, %v905, 0.0
      %v1128 = vadd.f32 %v1126, %v1127
      %v1129 = vsel %vm1087, %v908, 0.0
      %v1130 = vadd.f32 %v1128, %v1129
      %v1131 = vsel %vm1087, %v913, 0.0
      %v1132 = vadd.f32 %v1130, %v1131
      %v1133 = vsel %vm1087, %v916, 0.0
      %v1134 = vadd.f32 %v1132, %v1133
      %v1135 = vsel %vm1087, %v921, 0.0
      %v1136 = vadd.f32 %v1134, %v1135
      %v1137 = vsel %vm1087, %v924, 0.0
      %v1138 = vadd.f32 %v1136, %v1137
      %v1139 = vsel %vm1087, %v929, 0.0
      %v1140 = vadd.f32 %v1138, %v1139
      %v1141 = vsel %vm1087, %v932, 0.0
      %v1142 = vadd.f32 %v1140, %v1141
      %v1143 = vsel %vm1087, %v937, 0.0
      %v1144 = vadd.f32 %v1142, %v1143
      %v1145 = vsel %vm1087, %v940, 0.0
      %v1146 = vadd.f32 %v1144, %v1145
      %v1147 = vsel %vm1087, %v945, 0.0
      %v1148 = vadd.f32 %v1146, %v1147
      %v1149 = vsel %vm1087, %v948, 0.0
      %v1150 = vadd.f32 %v1148, %v1149
      %v1151 = vsel %vm1087, %v953, 0.0
      %v1152 = vadd.f32 %v1150, %v1151
      %v1153 = vsel %vm1087, %v956, 0.0
      %v1154 = vadd.f32 %v1152, %v1153
      %v1155 = vsel %vm1087, %v961, 0.0
      %v1156 = vadd.f32 %v1154, %v1155
      %v1157 = vsel %vm1087, %v964, 0.0
      %v1158 = vadd.f32 %v1156, %v1157
      %v1159 = vsel %vm1087, %v969, 0.0
      %v1160 = vadd.f32 %v1158, %v1159
      %v1161 = vsel %vm1087, %v972, 0.0
      %v1162 = vadd.f32 %v1160, %v1161
      %v1163 = vsel %vm1087, %v977, 0.0
      %v1164 = vadd.f32 %v1162, %v1163
      %v1165 = vsel %vm1087, %v980, 0.0
      %v1166 = vadd.f32 %v1164, %v1165
      %v1167 = vsel %vm1087, %v985, 0.0
      %v1168 = vadd.f32 %v1166, %v1167
      %v1169 = vsel %vm1087, %v988, 0.0
      %v1170 = vadd.f32 %v1168, %v1169
      %v1171 = vsel %vm1087, %v993, 0.0
      %v1172 = vadd.f32 %v1170, %v1171
      %v1173 = vsel %vm1087, %v996, 0.0
      %v1174 = vadd.f32 %v1172, %v1173
      %v1175 = vsel %vm1087, %v1001, 0.0
      %v1176 = vadd.f32 %v1174, %v1175
      %v1177 = vsel %vm1087, %v1004, 0.0
      %v1178 = vadd.f32 %v1176, %v1177
      %v1179 = vsel %vm1087, %v1009, 0.0
      %v1180 = vadd.f32 %v1178, %v1179
      %v1181 = vsel %vm1087, %v1012, 0.0
      %v1182 = vadd.f32 %v1180, %v1181
      %v1183 = vsel %vm1087, %v1017, 0.0
      %v1184 = vadd.f32 %v1182, %v1183
      %v1185 = vsel %vm1087, %v1020, 0.0
      %v1186 = vadd.f32 %v1184, %v1185
      %v1187 = vsel %vm1087, %v1025, 0.0
      %v1188 = vadd.f32 %v1186, %v1187
      %v1189 = vsel %vm1087, %v1028, 0.0
      %v1190 = vadd.f32 %v1188, %v1189
      %v1191 = vsel %vm1087, %v1033, 0.0
      %v1192 = vadd.f32 %v1190, %v1191
      %v1193 = vsel %vm1087, %v1036, 0.0
      %v1194 = vadd.f32 %v1192, %v1193
      %v1195 = vsel %vm1087, %v1041, 0.0
      %v1196 = vadd.f32 %v1194, %v1195
      %v1197 = vsel %vm1087, %v1044, 0.0
      %v1198 = vadd.f32 %v1196, %v1197
      %v1199 = vsel %vm1087, %v1049, 0.0
      %v1200 = vadd.f32 %v1198, %v1199
      %v1201 = vsel %vm1087, %v1052, 0.0
      %v1202 = vadd.f32 %v1200, %v1201
      %v1203 = vsel %vm1087, %v1057, 0.0
      %v1204 = vadd.f32 %v1202, %v1203
      %v1205 = vsel %vm1087, %v1060, 0.0
      %v1206 = vadd.f32 %v1204, %v1205
      %v1207 = vsel %vm1087, %v1065, 0.0
      %v1208 = vadd.f32 %v1206, %v1207
      %v1209 = vsel %vm1087, %v1068, 0.0
      %v1210 = vadd.f32 %v1208, %v1209
      %v1211 = vsel %vm1087, %v1073, 0.0
      %v1212 = vadd.f32 %v1210, %v1211
      %v1213 = vsel %vm1087, %v1076, 0.0
      %v1214 = vadd.f32 %v1212, %v1213
      %v1215 = vrot.slane %v1214, 4
      %v1216 = vadd.f32 %v1214, %v1215
      %v1217 = vrot.slane %v1216, 2
      %v1218 = vadd.f32 %v1216, %v1217
      %v1219 = vrot.slane %v1218, 1
      %v1220 = vadd.f32 %v1218, %v1219
      %v1221 = vadd.f32 %v1086, %v1220
      %vm1222 = vcmask 516096
      %1223 = vst.msk [vmem:[%s253] sm:$0x1] %vm1222, %v1221
      %v1224 = vld [vmem:[%s256] sm:$0x1]
      %v1225 = vmul.f32 %v825, %v825
      %v1226 = vmul.f32 %v828, %v828
      %v1227 = vmul.f32 %v833, %v833
      %v1228 = vmul.f32 %v836, %v836
      %v1229 = vmul.f32 %v841, %v841
      %v1230 = vmul.f32 %v844, %v844
      %v1231 = vmul.f32 %v849, %v849
      %v1232 = vmul.f32 %v852, %v852
      %v1233 = vmul.f32 %v857, %v857
      %v1234 = vmul.f32 %v860, %v860
      %v1235 = vmul.f32 %v865, %v865
      %v1236 = vmul.f32 %v868, %v868
      %v1237 = vmul.f32 %v873, %v873
      %v1238 = vmul.f32 %v876, %v876
      %v1239 = vmul.f32 %v881, %v881
      %v1240 = vmul.f32 %v884, %v884
      %v1241 = vmul.f32 %v889, %v889
      %v1242 = vmul.f32 %v892, %v892
      %v1243 = vmul.f32 %v897, %v897
      %v1244 = vmul.f32 %v900, %v900
      %v1245 = vmul.f32 %v905, %v905
      %v1246 = vmul.f32 %v908, %v908
      %v1247 = vmul.f32 %v913, %v913
      %v1248 = vmul.f32 %v916, %v916
      %v1249 = vmul.f32 %v921, %v921
      %v1250 = vmul.f32 %v924, %v924
      %v1251 = vmul.f32 %v929, %v929
      %v1252 = vmul.f32 %v932, %v932
      %v1253 = vmul.f32 %v937, %v937
      %v1254 = vmul.f32 %v940, %v940
      %v1255 = vmul.f32 %v945, %v945
      %v1256 = vmul.f32 %v948, %v948
      %v1257 = vmul.f32 %v953, %v953
      %v1258 = vmul.f32 %v956, %v956
      %v1259 = vmul.f32 %v961, %v961
      %v1260 = vmul.f32 %v964, %v964
      %v1261 = vmul.f32 %v969, %v969
      %v1262 = vmul.f32 %v972, %v972
      %v1263 = vmul.f32 %v977, %v977
      %v1264 = vmul.f32 %v980, %v980
      %v1265 = vmul.f32 %v985, %v985
      %v1266 = vmul.f32 %v988, %v988
      %v1267 = vmul.f32 %v993, %v993
      %v1268 = vmul.f32 %v996, %v996
      %v1269 = vmul.f32 %v1001, %v1001
      %v1270 = vmul.f32 %v1004, %v1004
      %v1271 = vmul.f32 %v1009, %v1009
      %v1272 = vmul.f32 %v1012, %v1012
      %v1273 = vmul.f32 %v1017, %v1017
      %v1274 = vmul.f32 %v1020, %v1020
      %v1275 = vmul.f32 %v1025, %v1025
      %v1276 = vmul.f32 %v1028, %v1028
      %v1277 = vmul.f32 %v1033, %v1033
      %v1278 = vmul.f32 %v1036, %v1036
      %v1279 = vmul.f32 %v1041, %v1041
      %v1280 = vmul.f32 %v1044, %v1044
      %v1281 = vmul.f32 %v1049, %v1049
      %v1282 = vmul.f32 %v1052, %v1052
      %v1283 = vmul.f32 %v1057, %v1057
      %v1284 = vmul.f32 %v1060, %v1060
      %v1285 = vmul.f32 %v1065, %v1065
      %v1286 = vmul.f32 %v1068, %v1068
      %v1287 = vmul.f32 %v1073, %v1073
      %v1288 = vmul.f32 %v1076, %v1076
      %v1289 = vsel %vm1087, %v1225, 0.0
      %v1290 = vsel %vm1087, %v1226, 0.0
      %v1291 = vadd.f32 %v1289, %v1290
      %v1292 = vsel %vm1087, %v1227, 0.0
      %v1293 = vadd.f32 %v1291, %v1292
      %v1294 = vsel %vm1087, %v1228, 0.0
      %v1295 = vadd.f32 %v1293, %v1294
      %v1296 = vsel %vm1087, %v1229, 0.0
      %v1297 = vadd.f32 %v1295, %v1296
      %v1298 = vsel %vm1087, %v1230, 0.0
      %v1299 = vadd.f32 %v1297, %v1298
      %v1300 = vsel %vm1087, %v1231, 0.0
      %v1301 = vadd.f32 %v1299, %v1300
      %v1302 = vsel %vm1087, %v1232, 0.0
      %v1303 = vadd.f32 %v1301, %v1302
      %v1304 = vsel %vm1087, %v1233, 0.0
      %v1305 = vadd.f32 %v1303, %v1304
      %v1306 = vsel %vm1087, %v1234, 0.0
      %v1307 = vadd.f32 %v1305, %v1306
      %v1308 = vsel %vm1087, %v1235, 0.0
      %v1309 = vadd.f32 %v1307, %v1308
      %v1310 = vsel %vm1087, %v1236, 0.0
      %v1311 = vadd.f32 %v1309, %v1310
      %v1312 = vsel %vm1087, %v1237, 0.0
      %v1313 = vadd.f32 %v1311, %v1312
      %v1314 = vsel %vm1087, %v1238, 0.0
      %v1315 = vadd.f32 %v1313, %v1314
      %v1316 = vsel %vm1087, %v1239, 0.0
      %v1317 = vadd.f32 %v1315, %v1316
      %v1318 = vsel %vm1087, %v1240, 0.0
      %v1319 = vadd.f32 %v1317, %v1318
      %v1320 = vsel %vm1087, %v1241, 0.0
      %v1321 = vadd.f32 %v1319, %v1320
      %v1322 = vsel %vm1087, %v1242, 0.0
      %v1323 = vadd.f32 %v1321, %v1322
      %v1324 = vsel %vm1087, %v1243, 0.0
      %v1325 = vadd.f32 %v1323, %v1324
      %v1326 = vsel %vm1087, %v1244, 0.0
      %v1327 = vadd.f32 %v1325, %v1326
      %v1328 = vsel %vm1087, %v1245, 0.0
      %v1329 = vadd.f32 %v1327, %v1328
      %v1330 = vsel %vm1087, %v1246, 0.0
      %v1331 = vadd.f32 %v1329, %v1330
      %v1332 = vsel %vm1087, %v1247, 0.0
      %v1333 = vadd.f32 %v1331, %v1332
      %v1334 = vsel %vm1087, %v1248, 0.0
      %v1335 = vadd.f32 %v1333, %v1334
      %v1336 = vsel %vm1087, %v1249, 0.0
      %v1337 = vadd.f32 %v1335, %v1336
      %v1338 = vsel %vm1087, %v1250, 0.0
      %v1339 = vadd.f32 %v1337, %v1338
      %v1340 = vsel %vm1087, %v1251, 0.0
      %v1341 = vadd.f32 %v1339, %v1340
      %v1342 = vsel %vm1087, %v1252, 0.0
      %v1343 = vadd.f32 %v1341, %v1342
      %v1344 = vsel %vm1087, %v1253, 0.0
      %v1345 = vadd.f32 %v1343, %v1344
      %v1346 = vsel %vm1087, %v1254, 0.0
      %v1347 = vadd.f32 %v1345, %v1346
      %v1348 = vsel %vm1087, %v1255, 0.0
      %v1349 = vadd.f32 %v1347, %v1348
      %v1350 = vsel %vm1087, %v1256, 0.0
      %v1351 = vadd.f32 %v1349, %v1350
      %v1352 = vsel %vm1087, %v1257, 0.0
      %v1353 = vadd.f32 %v1351, %v1352
      %v1354 = vsel %vm1087, %v1258, 0.0
      %v1355 = vadd.f32 %v1353, %v1354
      %v1356 = vsel %vm1087, %v1259, 0.0
      %v1357 = vadd.f32 %v1355, %v1356
      %v1358 = vsel %vm1087, %v1260, 0.0
      %v1359 = vadd.f32 %v1357, %v1358
      %v1360 = vsel %vm1087, %v1261, 0.0
      %v1361 = vadd.f32 %v1359, %v1360
      %v1362 = vsel %vm1087, %v1262, 0.0
      %v1363 = vadd.f32 %v1361, %v1362
      %v1364 = vsel %vm1087, %v1263, 0.0
      %v1365 = vadd.f32 %v1363, %v1364
      %v1366 = vsel %vm1087, %v1264, 0.0
      %v1367 = vadd.f32 %v1365, %v1366
      %v1368 = vsel %vm1087, %v1265, 0.0
      %v1369 = vadd.f32 %v1367, %v1368
      %v1370 = vsel %vm1087, %v1266, 0.0
      %v1371 = vadd.f32 %v1369, %v1370
      %v1372 = vsel %vm1087, %v1267, 0.0
      %v1373 = vadd.f32 %v1371, %v1372
      %v1374 = vsel %vm1087, %v1268, 0.0
      %v1375 = vadd.f32 %v1373, %v1374
      %v1376 = vsel %vm1087, %v1269, 0.0
      %v1377 = vadd.f32 %v1375, %v1376
      %v1378 = vsel %vm1087, %v1270, 0.0
      %v1379 = vadd.f32 %v1377, %v1378
      %v1380 = vsel %vm1087, %v1271, 0.0
      %v1381 = vadd.f32 %v1379, %v1380
      %v1382 = vsel %vm1087, %v1272, 0.0
      %v1383 = vadd.f32 %v1381, %v1382
      %v1384 = vsel %vm1087, %v1273, 0.0
      %v1385 = vadd.f32 %v1383, %v1384
      %v1386 = vsel %vm1087, %v1274, 0.0
      %v1387 = vadd.f32 %v1385, %v1386
      %v1388 = vsel %vm1087, %v1275, 0.0
      %v1389 = vadd.f32 %v1387, %v1388
      %v1390 = vsel %vm1087, %v1276, 0.0
      %v1391 = vadd.f32 %v1389, %v1390
      %v1392 = vsel %vm1087, %v1277, 0.0
      %v1393 = vadd.f32 %v1391, %v1392
      %v1394 = vsel %vm1087, %v1278, 0.0
      %v1395 = vadd.f32 %v1393, %v1394
      %v1396 = vsel %vm1087, %v1279, 0.0
      %v1397 = vadd.f32 %v1395, %v1396
      %v1398 = vsel %vm1087, %v1280, 0.0
      %v1399 = vadd.f32 %v1397, %v1398
      %v1400 = vsel %vm1087, %v1281, 0.0
      %v1401 = vadd.f32 %v1399, %v1400
      %v1402 = vsel %vm1087, %v1282, 0.0
      %v1403 = vadd.f32 %v1401, %v1402
      %v1404 = vsel %vm1087, %v1283, 0.0
      %v1405 = vadd.f32 %v1403, %v1404
      %v1406 = vsel %vm1087, %v1284, 0.0
      %v1407 = vadd.f32 %v1405, %v1406
      %v1408 = vsel %vm1087, %v1285, 0.0
      %v1409 = vadd.f32 %v1407, %v1408
      %v1410 = vsel %vm1087, %v1286, 0.0
      %v1411 = vadd.f32 %v1409, %v1410
      %v1412 = vsel %vm1087, %v1287, 0.0
      %v1413 = vadd.f32 %v1411, %v1412
      %v1414 = vsel %vm1087, %v1288, 0.0
      %v1415 = vadd.f32 %v1413, %v1414
      %v1416 = vrot.slane %v1415, 4
      %v1417 = vadd.f32 %v1415, %v1416
      %v1418 = vrot.slane %v1417, 2
      %v1419 = vadd.f32 %v1417, %v1418
      %v1420 = vrot.slane %v1419, 1
      %v1421 = vadd.f32 %v1419, %v1420
      %v1422 = vadd.f32 %v1224, %v1421
      %1423 = vst.msk [vmem:[%s256] sm:$0x1] %vm1222, %v1422
      %v1424 = vpack.c.bf16 %v828, %v825
      %v1425 = vpack.c.bf16 %v836, %v833
      %v1426 = vpack.c.bf16 %v844, %v841
      %v1427 = vpack.c.bf16 %v852, %v849
      %v1428 = vpack.c.bf16 %v860, %v857
      %v1429 = vpack.c.bf16 %v868, %v865
      %v1430 = vpack.c.bf16 %v876, %v873
      %v1431 = vpack.c.bf16 %v884, %v881
      %v1432 = vpack.c.bf16 %v892, %v889
      %v1433 = vpack.c.bf16 %v900, %v897
      %v1434 = vpack.c.bf16 %v908, %v905
      %v1435 = vpack.c.bf16 %v916, %v913
      %v1436 = vpack.c.bf16 %v924, %v921
      %v1437 = vpack.c.bf16 %v932, %v929
      %v1438 = vpack.c.bf16 %v940, %v937
      %v1439 = vpack.c.bf16 %v948, %v945
      %v1440 = vpack.c.bf16 %v956, %v953
      %v1441 = vpack.c.bf16 %v964, %v961
      %v1442 = vpack.c.bf16 %v972, %v969
      %v1443 = vpack.c.bf16 %v980, %v977
      %v1444 = vpack.c.bf16 %v988, %v985
      %v1445 = vpack.c.bf16 %v996, %v993
      %v1446 = vpack.c.bf16 %v1004, %v1001
      %v1447 = vpack.c.bf16 %v1012, %v1009
      %v1448 = vpack.c.bf16 %v1020, %v1017
      %v1449 = vpack.c.bf16 %v1028, %v1025
      %v1450 = vpack.c.bf16 %v1036, %v1033
      %v1451 = vpack.c.bf16 %v1044, %v1041
      %v1452 = vpack.c.bf16 %v1052, %v1049
      %v1453 = vpack.c.bf16 %v1060, %v1057
      %v1454 = vpack.c.bf16 %v1068, %v1065
      %v1455 = vpack.c.bf16 %v1076, %v1073
      %v1488 = vunpack.c.l.b16 %v1424
      %v1489 = vunpack.c.h.b16 %v1424
      %v1490 = vunpack.c.l.b16 %v1425
      %v1491 = vunpack.c.h.b16 %v1425
      %v1492 = vunpack.c.l.b16 %v1426
      %v1493 = vunpack.c.h.b16 %v1426
      %v1494 = vunpack.c.l.b16 %v1427
      %v1495 = vunpack.c.h.b16 %v1427
      %v1496 = vunpack.c.l.b16 %v1428
      %v1497 = vunpack.c.h.b16 %v1428
      %v1498 = vunpack.c.l.b16 %v1429
      %v1499 = vunpack.c.h.b16 %v1429
      %v1500 = vunpack.c.l.b16 %v1430
      %v1501 = vunpack.c.h.b16 %v1430
      %v1502 = vunpack.c.l.b16 %v1431
      %v1503 = vunpack.c.h.b16 %v1431
      %v1504 = vunpack.c.l.b16 %v1432
      %v1505 = vunpack.c.h.b16 %v1432
      %v1506 = vunpack.c.l.b16 %v1433
      %v1507 = vunpack.c.h.b16 %v1433
      %v1508 = vunpack.c.l.b16 %v1434
      %v1509 = vunpack.c.h.b16 %v1434
      %v1510 = vunpack.c.l.b16 %v1435
      %v1511 = vunpack.c.h.b16 %v1435
      %v1512 = vunpack.c.l.b16 %v1436
      %v1513 = vunpack.c.h.b16 %v1436
      %v1514 = vunpack.c.l.b16 %v1437
      %v1515 = vunpack.c.h.b16 %v1437
      %v1516 = vunpack.c.l.b16 %v1438
      %v1517 = vunpack.c.h.b16 %v1438
      %v1518 = vunpack.c.l.b16 %v1439
      %v1519 = vunpack.c.h.b16 %v1439
      %v1520 = vunpack.c.l.b16 %v1440
      %v1521 = vunpack.c.h.b16 %v1440
      %v1522 = vunpack.c.l.b16 %v1441
      %v1523 = vunpack.c.h.b16 %v1441
      %v1524 = vunpack.c.l.b16 %v1442
      %v1525 = vunpack.c.h.b16 %v1442
      %v1526 = vunpack.c.l.b16 %v1443
      %v1527 = vunpack.c.h.b16 %v1443
      %v1528 = vunpack.c.l.b16 %v1444
      %v1529 = vunpack.c.h.b16 %v1444
      %v1530 = vunpack.c.l.b16 %v1445
      %v1531 = vunpack.c.h.b16 %v1445
      %v1532 = vunpack.c.l.b16 %v1446
      %v1533 = vunpack.c.h.b16 %v1446
      %v1534 = vunpack.c.l.b16 %v1447
      %v1535 = vunpack.c.h.b16 %v1447
      %v1536 = vunpack.c.l.b16 %v1448
      %v1537 = vunpack.c.h.b16 %v1448
      %v1538 = vunpack.c.l.b16 %v1449
      %v1539 = vunpack.c.h.b16 %v1449
      %v1540 = vunpack.c.l.b16 %v1450
      %v1541 = vunpack.c.h.b16 %v1450
      %v1542 = vunpack.c.l.b16 %v1451
      %v1543 = vunpack.c.h.b16 %v1451
      %v1544 = vunpack.c.l.b16 %v1452
      %v1545 = vunpack.c.h.b16 %v1452
      %v1546 = vunpack.c.l.b16 %v1453
      %v1547 = vunpack.c.h.b16 %v1453
      %v1548 = vunpack.c.l.b16 %v1454
      %v1549 = vunpack.c.h.b16 %v1454
      %v1550 = vunpack.c.l.b16 %v1455
      %v1551 = vunpack.c.h.b16 %v1455
      %v1552 = vpack.c.b16 %v1488, %v1488
      %v1553 = vpack.c.b16 %v1489, %v1489
      %v1554 = vpack.c.b16 %v1490, %v1490
      %v1555 = vpack.c.b16 %v1491, %v1491
      %v1556 = vpack.c.b16 %v1492, %v1492
      %v1557 = vpack.c.b16 %v1493, %v1493
      %v1558 = vpack.c.b16 %v1494, %v1494
      %v1559 = vpack.c.b16 %v1495, %v1495
      %v1560 = vpack.c.b16 %v1496, %v1496
      %v1561 = vpack.c.b16 %v1497, %v1497
      %v1562 = vpack.c.b16 %v1498, %v1498
      %v1563 = vpack.c.b16 %v1499, %v1499
      %v1564 = vpack.c.b16 %v1500, %v1500
      %v1565 = vpack.c.b16 %v1501, %v1501
      %v1566 = vpack.c.b16 %v1502, %v1502
      %v1567 = vpack.c.b16 %v1503, %v1503
      %v1568 = vpack.c.b16 %v1504, %v1504
      %v1569 = vpack.c.b16 %v1505, %v1505
      %v1570 = vpack.c.b16 %v1506, %v1506
      %v1571 = vpack.c.b16 %v1507, %v1507
      %v1572 = vpack.c.b16 %v1508, %v1508
      %v1573 = vpack.c.b16 %v1509, %v1509
      %v1574 = vpack.c.b16 %v1510, %v1510
      %v1575 = vpack.c.b16 %v1511, %v1511
      %v1576 = vpack.c.b16 %v1512, %v1512
      %v1577 = vpack.c.b16 %v1513, %v1513
      %v1578 = vpack.c.b16 %v1514, %v1514
      %v1579 = vpack.c.b16 %v1515, %v1515
      %v1580 = vpack.c.b16 %v1516, %v1516
      %v1581 = vpack.c.b16 %v1517, %v1517
      %v1582 = vpack.c.b16 %v1518, %v1518
      %v1583 = vpack.c.b16 %v1519, %v1519
      %v1584 = vpack.c.b16 %v1520, %v1520
      %v1585 = vpack.c.b16 %v1521, %v1521
      %v1586 = vpack.c.b16 %v1522, %v1522
      %v1587 = vpack.c.b16 %v1523, %v1523
      %v1588 = vpack.c.b16 %v1524, %v1524
      %v1589 = vpack.c.b16 %v1525, %v1525
      %v1590 = vpack.c.b16 %v1526, %v1526
      %v1591 = vpack.c.b16 %v1527, %v1527
      %v1592 = vpack.c.b16 %v1528, %v1528
      %v1593 = vpack.c.b16 %v1529, %v1529
      %v1594 = vpack.c.b16 %v1530, %v1530
      %v1595 = vpack.c.b16 %v1531, %v1531
      %v1596 = vpack.c.b16 %v1532, %v1532
      %v1597 = vpack.c.b16 %v1533, %v1533
      %v1598 = vpack.c.b16 %v1534, %v1534
      %v1599 = vpack.c.b16 %v1535, %v1535
      %v1600 = vpack.c.b16 %v1536, %v1536
      %v1601 = vpack.c.b16 %v1537, %v1537
      %v1602 = vpack.c.b16 %v1538, %v1538
      %v1603 = vpack.c.b16 %v1539, %v1539
      %v1604 = vpack.c.b16 %v1540, %v1540
      %v1605 = vpack.c.b16 %v1541, %v1541
      %v1606 = vpack.c.b16 %v1542, %v1542
      %v1607 = vpack.c.b16 %v1543, %v1543
      %v1608 = vpack.c.b16 %v1544, %v1544
      %v1609 = vpack.c.b16 %v1545, %v1545
      %v1610 = vpack.c.b16 %v1546, %v1546
      %v1611 = vpack.c.b16 %v1547, %v1547
      %v1612 = vpack.c.b16 %v1548, %v1548
      %v1613 = vpack.c.b16 %v1549, %v1549
      %v1614 = vpack.c.b16 %v1550, %v1550
      %v1615 = vpack.c.b16 %v1551, %v1551
      %vm1680 = vcmask 519168
      %1681 = vst.msk [vmem:[%s249] sm:$0xf] %vm1680, %v1552
      %1682 = vst.msk [vmem:[%s249 + $0x4] sm:$0xf] %vm1680, %v1553
      %1683 = vst.msk [vmem:[%s249 + $0x8] sm:$0xf] %vm1680, %v1554
      %1684 = vst.msk [vmem:[%s249 + $0xc] sm:$0xf] %vm1680, %v1555
      %1685 = vst.msk [vmem:[%s249 + $0x10] sm:$0xf] %vm1680, %v1556
      %1686 = vst.msk [vmem:[%s249 + $0x14] sm:$0xf] %vm1680, %v1557
      %1687 = vst.msk [vmem:[%s249 + $0x18] sm:$0xf] %vm1680, %v1558
      %1688 = vst.msk [vmem:[%s249 + $0x1c] sm:$0xf] %vm1680, %v1559
      %1689 = vst.msk [vmem:[%s249 + $0x20] sm:$0xf] %vm1680, %v1560
      %1690 = vst.msk [vmem:[%s249 + $0x24] sm:$0xf] %vm1680, %v1561
      %1691 = vst.msk [vmem:[%s249 + $0x28] sm:$0xf] %vm1680, %v1562
      %1692 = vst.msk [vmem:[%s249 + $0x2c] sm:$0xf] %vm1680, %v1563
      %1693 = vst.msk [vmem:[%s249 + $0x30] sm:$0xf] %vm1680, %v1564
      %1694 = vst.msk [vmem:[%s249 + $0x34] sm:$0xf] %vm1680, %v1565
      %1695 = vst.msk [vmem:[%s249 + $0x38] sm:$0xf] %vm1680, %v1566
      %1696 = vst.msk [vmem:[%s249 + $0x3c] sm:$0xf] %vm1680, %v1567
      %1697 = vst.msk [vmem:[%s249 + $0x40] sm:$0xf] %vm1680, %v1568
      %1698 = vst.msk [vmem:[%s249 + $0x44] sm:$0xf] %vm1680, %v1569
      %1699 = vst.msk [vmem:[%s249 + $0x48] sm:$0xf] %vm1680, %v1570
      %1700 = vst.msk [vmem:[%s249 + $0x4c] sm:$0xf] %vm1680, %v1571
      %1701 = vst.msk [vmem:[%s249 + $0x50] sm:$0xf] %vm1680, %v1572
      %1702 = vst.msk [vmem:[%s249 + $0x54] sm:$0xf] %vm1680, %v1573
      %1703 = vst.msk [vmem:[%s249 + $0x58] sm:$0xf] %vm1680, %v1574
      %1704 = vst.msk [vmem:[%s249 + $0x5c] sm:$0xf] %vm1680, %v1575
      %1705 = vst.msk [vmem:[%s249 + $0x60] sm:$0xf] %vm1680, %v1576
      %1706 = vst.msk [vmem:[%s249 + $0x64] sm:$0xf] %vm1680, %v1577
      %1707 = vst.msk [vmem:[%s249 + $0x68] sm:$0xf] %vm1680, %v1578
      %1708 = vst.msk [vmem:[%s249 + $0x6c] sm:$0xf] %vm1680, %v1579
      %1709 = vst.msk [vmem:[%s249 + $0x70] sm:$0xf] %vm1680, %v1580
      %1710 = vst.msk [vmem:[%s249 + $0x74] sm:$0xf] %vm1680, %v1581
      %1711 = vst.msk [vmem:[%s249 + $0x78] sm:$0xf] %vm1680, %v1582
      %1712 = vst.msk [vmem:[%s249 + $0x7c] sm:$0xf] %vm1680, %v1583
      %1713 = vst.msk [vmem:[%s249 + $0x80] sm:$0xf] %vm1680, %v1584
      %1714 = vst.msk [vmem:[%s249 + $0x84] sm:$0xf] %vm1680, %v1585
      %1715 = vst.msk [vmem:[%s249 + $0x88] sm:$0xf] %vm1680, %v1586
      %1716 = vst.msk [vmem:[%s249 + $0x8c] sm:$0xf] %vm1680, %v1587
      %1717 = vst.msk [vmem:[%s249 + $0x90] sm:$0xf] %vm1680, %v1588
      %1718 = vst.msk [vmem:[%s249 + $0x94] sm:$0xf] %vm1680, %v1589
      %1719 = vst.msk [vmem:[%s249 + $0x98] sm:$0xf] %vm1680, %v1590
      %1720 = vst.msk [vmem:[%s249 + $0x9c] sm:$0xf] %vm1680, %v1591
      %1721 = vst.msk [vmem:[%s249 + $0xa0] sm:$0xf] %vm1680, %v1592
      %1722 = vst.msk [vmem:[%s249 + $0xa4] sm:$0xf] %vm1680, %v1593
      %1723 = vst.msk [vmem:[%s249 + $0xa8] sm:$0xf] %vm1680, %v1594
      %1724 = vst.msk [vmem:[%s249 + $0xac] sm:$0xf] %vm1680, %v1595
      %1725 = vst.msk [vmem:[%s249 + $0xb0] sm:$0xf] %vm1680, %v1596
      %1726 = vst.msk [vmem:[%s249 + $0xb4] sm:$0xf] %vm1680, %v1597
      %1727 = vst.msk [vmem:[%s249 + $0xb8] sm:$0xf] %vm1680, %v1598
      %1728 = vst.msk [vmem:[%s249 + $0xbc] sm:$0xf] %vm1680, %v1599
      %1729 = vst.msk [vmem:[%s249 + $0xc0] sm:$0xf] %vm1680, %v1600
      %1730 = vst.msk [vmem:[%s249 + $0xc4] sm:$0xf] %vm1680, %v1601
      %1731 = vst.msk [vmem:[%s249 + $0xc8] sm:$0xf] %vm1680, %v1602
      %1732 = vst.msk [vmem:[%s249 + $0xcc] sm:$0xf] %vm1680, %v1603
      %1733 = vst.msk [vmem:[%s249 + $0xd0] sm:$0xf] %vm1680, %v1604
      %1734 = vst.msk [vmem:[%s249 + $0xd4] sm:$0xf] %vm1680, %v1605
      %1735 = vst.msk [vmem:[%s249 + $0xd8] sm:$0xf] %vm1680, %v1606
      %1736 = vst.msk [vmem:[%s249 + $0xdc] sm:$0xf] %vm1680, %v1607
      %1737 = vst.msk [vmem:[%s249 + $0xe0] sm:$0xf] %vm1680, %v1608
      %1738 = vst.msk [vmem:[%s249 + $0xe4] sm:$0xf] %vm1680, %v1609
      %1739 = vst.msk [vmem:[%s249 + $0xe8] sm:$0xf] %vm1680, %v1610
      %1740 = vst.msk [vmem:[%s249 + $0xec] sm:$0xf] %vm1680, %v1611
      %1741 = vst.msk [vmem:[%s249 + $0xf0] sm:$0xf] %vm1680, %v1612
      %1742 = vst.msk [vmem:[%s249 + $0xf4] sm:$0xf] %vm1680, %v1613
      %1743 = vst.msk [vmem:[%s249 + $0xf8] sm:$0xf] %vm1680, %v1614
      %1744 = vst.msk [vmem:[%s249 + $0xfc] sm:$0xf] %vm1680, %v1615
      %s1745 = smul.u32 64, %s21
      %p1746 = scmp.lt.s32.totalorder %s20, 0
      %s1747 = scalar_select %p1746, %s20, 0
      %p1748 = scmp.lt.s32.totalorder %s1745, 127
      %s1749 = scalar_select %p1748, %s1745, 127
      %s1750 = smul.addr %s1747, 128
      %s1751 = sadd.s32 %s1749, %s1750
      %s1752 = smul.addr %s1751, 4
      %s1753 = scalar_lea.vmem %s2, %s1752
      %p1754 = scmp.lt.s32.totalorder %s20, 0
      %s1755 = scalar_select %p1754, %s20, 0
      %s1756 = scalar_lea.vmem %s3, %s1755
      %p1757 = scmp.lt.s32.totalorder %s20, 0
      %s1758 = scalar_select %p1757, %s20, 0
      %s1759 = scalar_lea.vmem %s4, %s1758
      // Predicated region
      $region33: #{run.2} parent=27 // pred_check
        %p1760 = pneg %p97
      $region34: #{run.2} parent=27 // pred_check_branch
        %1762 = sbr.rel (%p1760) target = $region36
      $region35: #{run.2} parent=27 // pred_region
        %s1763 = smul.u32 64, %s21
      $region36: #{run.2} parent=27 // pred_fallthru
        _
      // Predicated region
      $region37: #{run.2} parent=27 // pred_check
        %p1764 = pneg %p123
      $region38: #{run.2} parent=27 // pred_check_branch
        %1766 = sbr.rel (%p1764) target = $region40
      $region39: #{run.2} parent=27 // pred_region
        _
      $region40: #{run.2} parent=27 // pred_fallthru
        _
      // Predicated region
      $region41: #{run.2} parent=27 // pred_check
        %p1767 = pneg %p149
      $region42: #{run.2} parent=27 // pred_check_branch
        %1769 = sbr.rel (%p1767) target = $region44
      $region43: #{run.2} parent=27 // pred_region
        _
      $region44: #{run.2} parent=27 // pred_fallthru
        _
      // Predicated region
      $region45: #{run.2} parent=27 // pred_check
        %p1770 = pneg %p123
      $region46: #{run.2} parent=27 // pred_check_branch
        %1772 = sbr.rel (%p1770) target = $region48
      $region47: #{run.2} parent=27 // pred_region
        %p1773 = scmp.lt.s32.totalorder %s20, 0
        %s1774 = scalar_select %p1773, %s20, 0
        %s1775 = scalar_lea.vmem %s3, %s1774
      $region48: #{run.2} parent=27 // pred_fallthru
        _
      // Predicated region
      $region49: #{run.2} parent=27 // pred_check
        %p1776 = pneg %p149
      $region50: #{run.2} parent=27 // pred_check_branch
        %1778 = sbr.rel (%p1776) target = $region52
      $region51: #{run.2} parent=27 // pred_region
        %p1779 = scmp.lt.s32.totalorder %s20, 0
        %s1780 = scalar_select %p1779, %s20, 0
        %s1781 = scalar_lea.vmem %s4, %s1780
      $region52: #{run.2} parent=27 // pred_fallthru
        _
    $region28: #{run.2} parent=5 // pred_fallthru
      _
    %p1782 = scmp.le.s32.totalorder 2, %s11
    // Predicated region
    $region53: #{run.2} parent=5 // pred_check
      %p1783 = pneg %p1782
    $region54: #{run.2} parent=5 // pred_check_branch
      %1785 = sbr.rel (%p1783) target = $region56
    $region55: #{run.2} parent=5 // pred_region
      %s1786 = ssub.s32 %s11, 2
      // Predicated region
      $region57: #{run.2} parent=55 // pred_check
        %p1787 = pneg %p103
      $region58: #{run.2} parent=55 // pred_check_branch
        %1789 = sbr.rel (%p1787) target = $region60
      $region59: #{run.2} parent=55 // pred_region
        %s1790 = smul.u32 64, %s23
        %p1791 = scmp.lt.s32.totalorder %s22, 0
        %s1792 = scalar_select %p1791, %s22, 0
        %p1793 = scmp.lt.s32.totalorder %s1790, 127
        %s1794 = scalar_select %p1793, %s1790, 127
        %s1795 = smul.addr %s1792, 128
        %s1796 = sadd.s32 %s1794, %s1795
        %s1797 = smul.addr %s1796, 4
        %s1798 = scalar_lea.vmem %s2, %s1797
      $region60: #{run.2} parent=55 // pred_fallthru
        _
    $region56: #{run.2} parent=5 // pred_fallthru
      _
  $region6: #{run.2} parent=0 // loop_footer
    %s15 = sadd.s32 1, %s11
  $region7: #{run.2} parent=0 // loop_footer_branch
    %10 = sbr.rel target = $region3
  $region8: #{run.2} parent=0 // loop_exit
    _

</llo_original>
